<compile_context>
chip_gen: v5e
topology: v5e:2x2
jax: 0.10.0
libtpu: 0.0.40
codegen_flags: <defaults>
</compile_context>

<pallas_src>
import jax
import jax.numpy as jnp
import numpy as np
from jax import lax
from jax.experimental import pallas as pl
from jax.experimental.pallas import tpu as pltpu

EMB = 40          # emb_size
C = 40            # shallownet channels
K1 = 20           # Conv2d(1, 40, (1, 20))
K2 = 15           # Conv2d(40, 40, (1, 15))
POOL_K, POOL_S = 20, 10   # AvgPool2d((1, 20), (1, 10))
BN_EPS = 1e-5


def _choose_tr(R, W):
    """Rows per grid step.  Cap TR so the (600, TR*W) conv2 im2col stays at
    ~10 MB of VMEM, and keep >= 2 grid steps when possible so the 'parallel'
    grid axis can be sharded across TensorCores (v7x has 2 TCs)."""
    lane_budget = 4096                      # target TR*W lanes per step
    tr = max(1, min(R, lane_budget // max(W, 1)))
    if tr >= R and R > 1:
        tr = (R + 1) // 2
    return tr


def _make_kernel(Lm, L, mxu_dtype):
    """Lm = conv1 output width (L + K2 - 1), L = TR*W working width."""

    def kernel(x_ref, w1_ref, t1_ref, w2f_ref, t2_ref,
               wp_ref, bp_ref, pool_ref, out_ref):
        xp = x_ref[0]                                             # (1, Li)

        # ---- Conv2d(1, C, (1, K1)): one MXU matmul over a 20-tap im2col.
        #      BN1 scale is pre-folded into w1; only the shift remains. ----
        x1 = jnp.concatenate([xp[:, k:k + Lm] for k in range(K1)], axis=0)   # (K1, Lm)
        y1 = jnp.dot(w1_ref[...], x1.astype(mxu_dtype),
                     preferred_element_type=jnp.float32)          # (C, Lm)
        y1 = y1 + t1_ref[...]
        # ELU: exp(min(y,0)) - 1 — abs error vs expm1 ~1e-7 (f32), well inside
        # the 1e-4 budget, and avoids overflow in the unused branch.
        y1 = jnp.where(y1 > 0, y1, jnp.exp(jnp.minimum(y1, 0.0)) - 1.0)

        # ---- Conv2d(C, C, (1, K2)): single 600-deep im2col matmul.
        #      BN2 scale pre-folded into w2f. ----
        x2 = jnp.concatenate([y1[:, k:k + L] for k in range(K2)], axis=0)    # (K2*C, L)
        y2 = jnp.dot(w2f_ref[...], x2.astype(mxu_dtype),
                     preferred_element_type=jnp.float32)          # (C, L)
        y2 = y2 + t2_ref[...]
        y2 = jnp.where(y2 > 0, y2, jnp.exp(jnp.minimum(y2, 0.0)) - 1.0)

        # ---- AvgPool2d((1,20),(1,10)) + valid-column selection fused into one
        #      matmul with a block-diagonal (per-row) pooling matrix, THEN the
        #      1x1 projection on the narrow pooled block (module order).
        #      Dropout(0.5): identity at inference. ----
        pooled = jnp.dot(y2, pool_ref[...],
                         preferred_element_type=jnp.float32)      # (C, TR*W3)
        proj = jnp.dot(wp_ref[...], pooled.astype(mxu_dtype),
                       preferred_element_type=jnp.float32)        # (EMB, TR*W3)
        out_ref[0] = proj + bp_ref[...]

    return kernel


def patch_embedding_forward(x, params, *, mxu_dtype=jnp.float32):
    """PatchEmbedding forward.  On v6e/v7x, mxu_dtype=jnp.bfloat16 roughly
    halves MXU time (f32 accumulation kept); default stays f32 so the 1e-4
    parity check against the f32 reference holds."""
    if x.ndim == 3:                      # matches `if x.dim() == 3: x.unsqueeze(1)`
        x = x[:, None]
    B, Cin, H, W = x.shape
    assert Cin == 1
    W1 = W - K1 + 1
    W2 = W1 - K2 + 1
    W3 = (W2 - POOL_K) // POOL_S + 1
    assert W1 > 0 and W2 > 0 and W3 > 0
    R = B * H

    TR = _choose_tr(R, W)
    G = -(-R // TR)                      # ceil-div: number of grid steps
    R_pad = G * TR
    L = TR * W                           # flat (row, time) working width per block
    Lm = L + K2 - 1                      # conv1 output width (covers conv2 taps)
    Li = Lm + K1 - 1                     # padded input width (covers conv1 taps)
    n_out = TR * W3                      # lane-dense output width per block

    # ---- host-side data prep (plain-XLA glue) ----
    x_rows = x.astype(jnp.float32).reshape(R, W)
    if R_pad > R:
        x_rows = jnp.concatenate(
            [x_rows, jnp.zeros((R_pad - R, W), jnp.float32)], axis=0)
    xb = x_rows.reshape(G, L)
    xb = jnp.pad(xb, ((0, 0), (0, Li - L)))[:, None, :]           # (G, 1, Li)

    # Block-diagonal pooling matrix (L, TR*W3): column (r, j) averages the 20
    # samples [10j, 10j+20) of row r; garbage/invalid columns are never read.
    p_idx = np.arange(L)
    rp, t = p_idx // W, p_idx % W
    q_idx = np.arange(n_out)
    rq, j = q_idx // W3, q_idx % W3
    mask = ((rp[:, None] == rq[None, :])
            & (t[:, None] >= POOL_S * j[None, :])
            & (t[:, None] < POOL_S * j[None, :] + POOL_K))
    pool = jnp.asarray(mask.astype(np.float32) / POOL_K)          # (L, TR*W3)

    # Pre-reshaped / pre-cast weights; conv biases folded into the BN shifts,
    # BN scales folded into the conv weights (one-time host ops on tiny tensors).
    w1s = (params['w1'] * params['s1']).astype(mxu_dtype)                  # (C, K1)
    w2f = jnp.transpose(params['w2'], (1, 0, 2)).reshape(C, K2 * C)        # row=c_out, col=k*C+c_in
    w2fs = (w2f * params['s2']).astype(mxu_dtype)                          # (C, K2*C)
    wp = params['wp'].astype(mxu_dtype)                                    # (EMB, C)
    t1 = params['t1'] + params['b1'] * params['s1']
    t2 = params['t2'] + params['b2'] * params['s2']

    inputs = (xb, w1s, t1, w2fs, t2, wp, params['bp'], pool)

    def const_spec(a):                   # full-block, resident across grid steps
        nd = a.ndim
        return pl.BlockSpec(a.shape, lambda g, _nd=nd: (0,) * _nd)

    in_specs = [pl.BlockSpec((1, 1, Li), lambda g: (g, 0, 0))]
    in_specs += [const_spec(a) for a in inputs[1:]]

    out = pl.pallas_call(
        _make_kernel(Lm, L, mxu_dtype),
        out_shape=jax.ShapeDtypeStruct((G, EMB, n_out), jnp.float32),
        grid=(G,),
        in_specs=in_specs,
        out_specs=pl.BlockSpec((1, EMB, n_out), lambda g: (g, 0, 0)),
        compiler_params=pltpu.CompilerParams(
            dimension_semantics=("parallel",),
            vmem_limit_bytes=48 * 1024 * 1024),
    )(*inputs)

    # (G, EMB, TR*W3) -> Rearrange('b e h w -> b (h w) e')  — plain-JAX glue
    out = out.reshape(G, EMB, TR, W3).transpose(0, 2, 3, 1).reshape(R_pad, W3, EMB)
    out = out[:R].reshape(B, H, W3, EMB).reshape(B, H * W3, EMB)
    return out


def init_params(key):
    ks = jax.random.split(key, 14)
    u = lambda k, shape, lo, hi: jax.random.uniform(k, shape, jnp.float32, lo, hi)

    w1 = u(ks[0], (C, K1), -0.3, 0.3)            # Conv2d(1,40,(1,20)).weight[:,0,0,:]
    b1 = u(ks[1], (C, 1), -0.1, 0.1)
    w2 = u(ks[2], (K2, C, C), -0.1, 0.1)         # Conv2d(40,40,(1,15)).weight -> (k,out,in)
    b2 = u(ks[3], (C, 1), -0.1, 0.1)
    wp = u(ks[4], (EMB, C), -0.2, 0.2)           # Conv2d(40,emb,(1,1)).weight[:,:,0,0]
    bp = u(ks[5], (EMB, 1), -0.1, 0.1)

    # BatchNorm2d running stats / affine params (deterministic, non-trivial)
    g1, be1 = u(ks[6], (C,), 0.8, 1.2), u(ks[7], (C,), -0.1, 0.1)
    m1, v1 = u(ks[8], (C,), -0.1, 0.1), u(ks[9], (C,), 0.5, 1.5)
    g2, be2 = u(ks[10], (C,), 0.8, 1.2), u(ks[11], (C,), -0.1, 0.1)
    m2, v2 = u(ks[12], (C,), -0.1, 0.1), u(ks[13], (C,), 0.5, 1.5)

    s1 = g1 / jnp.sqrt(v1 + BN_EPS)
    s2 = g2 / jnp.sqrt(v2 + BN_EPS)
    return dict(
        w1=w1, b1=b1, w2=w2, b2=b2, wp=wp, bp=bp,
        s1=s1.reshape(C, 1), t1=(be1 - m1 * s1).reshape(C, 1),
        s2=s2.reshape(C, 1), t2=(be2 - m2 * s2).reshape(C, 1),
    )


def ref_forward(x, p):
    """Pure-JAX reference (NCHW convs) for correctness check."""
    def conv(z, w, b):
        y = lax.conv_general_dilated(z, w, (1, 1), 'VALID',
                                     dimension_numbers=('NCHW', 'OIHW', 'NCHW'))
        return y + b[None, :, None, None]

    def bn(z, s, t):
        return z * s[None, :, None, None] + t[None, :, None, None]

    elu = lambda z: jnp.where(z > 0, z, jnp.expm1(jnp.minimum(z, 0.0)))

    w1_4d = p['w1'].reshape(C, 1, 1, K1)
    w2_4d = jnp.transpose(p['w2'], (1, 2, 0)).reshape(C, C, 1, K2)
    wp_4d = p['wp'].reshape(EMB, C, 1, 1)

    y = elu(bn(conv(x, w1_4d, p['b1'][:, 0]), p['s1'][:, 0], p['t1'][:, 0]))
    y = elu(bn(conv(y, w2_4d, p['b2'][:, 0]), p['s2'][:, 0], p['t2'][:, 0]))
    y = lax.reduce_window(y, 0.0, lax.add, (1, 1, 1, POOL_K),
                          (1, 1, 1, POOL_S), 'VALID') / POOL_K
    y = conv(y, wp_4d, p['bp'][:, 0])
    B, E, H, Wc = y.shape
    return jnp.transpose(y, (0, 2, 3, 1)).reshape(B, H * Wc, E)


if __name__ == "__main__":
    B, H, W = 2, 2, 73        # small: 2 batches, 2 electrode rows, 73 time samples
    key = jax.random.PRNGKey(0)
    pkey, xkey = jax.random.split(key)
    params = init_params(pkey)
    x = jax.random.normal(xkey, (B, 1, H, W), jnp.float32)

    out = jax.block_until_ready(patch_embedding_forward(x, params))
    ref = jax.block_until_ready(ref_forward(x, params))

    W3 = ((W - K1 + 1 - K2 + 1) - POOL_K) // POOL_S + 1
    assert out.shape == (B, H * W3, EMB), out.shape
    np.testing.assert_allclose(np.asarray(out), np.asarray(ref), rtol=1e-4, atol=1e-4)
    print("KERNEL_OK")
</pallas_src>

<mosaic_0001>
module attributes {stable_mosaic.version = 11 : i64} {
  func.func @kernel(%arg0: i32, %arg1: memref<1x1x179xf32, #tpu.memory_space<vmem>>, %arg2: memref<40x20xf32, #tpu.memory_space<vmem>>, %arg3: memref<40x1xf32, #tpu.memory_space<vmem>>, %arg4: memref<40x600xf32, #tpu.memory_space<vmem>>, %arg5: memref<40x1xf32, #tpu.memory_space<vmem>>, %arg6: memref<40x40xf32, #tpu.memory_space<vmem>>, %arg7: memref<40x1xf32, #tpu.memory_space<vmem>>, %arg8: memref<146x6xf32, #tpu.memory_space<vmem>>, %arg9: memref<1x40x6xf32, #tpu.memory_space<vmem>>) attributes {dimension_semantics = [#tpu.dimension_semantics<parallel>], iteration_bounds = array<i64: 2>, scalar_prefetch = 0 : i64, scratch_operands = 0 : i64, tpu.core_type = #tpu.core_type<tc>, window_params = [{transform_indices = @transform_0, window_bounds = array<i64: 1, 1, 179>}, {pipeline_mode = #tpu.pipeline_mode<synchronous>, transform_indices = @transform_1, window_bounds = array<i64: 40, 20>}, {pipeline_mode = #tpu.pipeline_mode<synchronous>, transform_indices = @transform_2, window_bounds = array<i64: 40, 1>}, {pipeline_mode = #tpu.pipeline_mode<synchronous>, transform_indices = @transform_3, window_bounds = array<i64: 40, 600>}, {pipeline_mode = #tpu.pipeline_mode<synchronous>, transform_indices = @transform_4, window_bounds = array<i64: 40, 1>}, {pipeline_mode = #tpu.pipeline_mode<synchronous>, transform_indices = @transform_5, window_bounds = array<i64: 40, 40>}, {pipeline_mode = #tpu.pipeline_mode<synchronous>, transform_indices = @transform_6, window_bounds = array<i64: 40, 1>}, {pipeline_mode = #tpu.pipeline_mode<synchronous>, transform_indices = @transform_7, window_bounds = array<i64: 146, 6>}, {transform_indices = @transform_8, window_bounds = array<i64: 1, 40, 6>}]} {
    %c0 = arith.constant 0 : index
    %c0_0 = arith.constant 0 : index
    %c0_1 = arith.constant 0 : index
    %0 = vector.load %arg1[%c0, %c0_0, %c0_1] : memref<1x1x179xf32, #tpu.memory_space<vmem>>, vector<1x1x179xf32>
    %1 = vector.shape_cast %0 : vector<1x1x179xf32> to vector<1x179xf32>
    %2 = vector.extract_strided_slice %1 {offsets = [0, 0], sizes = [1, 160], strides = [1, 1]} : vector<1x179xf32> to vector<1x160xf32>
    %3 = vector.extract_strided_slice %1 {offsets = [0, 1], sizes = [1, 160], strides = [1, 1]} : vector<1x179xf32> to vector<1x160xf32>
    %4 = vector.extract_strided_slice %1 {offsets = [0, 2], sizes = [1, 160], strides = [1, 1]} : vector<1x179xf32> to vector<1x160xf32>
    %5 = vector.extract_strided_slice %1 {offsets = [0, 3], sizes = [1, 160], strides = [1, 1]} : vector<1x179xf32> to vector<1x160xf32>
    %6 = vector.extract_strided_slice %1 {offsets = [0, 4], sizes = [1, 160], strides = [1, 1]} : vector<1x179xf32> to vector<1x160xf32>
    %7 = vector.extract_strided_slice %1 {offsets = [0, 5], sizes = [1, 160], strides = [1, 1]} : vector<1x179xf32> to vector<1x160xf32>
    %8 = vector.extract_strided_slice %1 {offsets = [0, 6], sizes = [1, 160], strides = [1, 1]} : vector<1x179xf32> to vector<1x160xf32>
    %9 = vector.extract_strided_slice %1 {offsets = [0, 7], sizes = [1, 160], strides = [1, 1]} : vector<1x179xf32> to vector<1x160xf32>
    %10 = vector.extract_strided_slice %1 {offsets = [0, 8], sizes = [1, 160], strides = [1, 1]} : vector<1x179xf32> to vector<1x160xf32>
    %11 = vector.extract_strided_slice %1 {offsets = [0, 9], sizes = [1, 160], strides = [1, 1]} : vector<1x179xf32> to vector<1x160xf32>
    %12 = vector.extract_strided_slice %1 {offsets = [0, 10], sizes = [1, 160], strides = [1, 1]} : vector<1x179xf32> to vector<1x160xf32>
    %13 = vector.extract_strided_slice %1 {offsets = [0, 11], sizes = [1, 160], strides = [1, 1]} : vector<1x179xf32> to vector<1x160xf32>
    %14 = vector.extract_strided_slice %1 {offsets = [0, 12], sizes = [1, 160], strides = [1, 1]} : vector<1x179xf32> to vector<1x160xf32>
    %15 = vector.extract_strided_slice %1 {offsets = [0, 13], sizes = [1, 160], strides = [1, 1]} : vector<1x179xf32> to vector<1x160xf32>
    %16 = vector.extract_strided_slice %1 {offsets = [0, 14], sizes = [1, 160], strides = [1, 1]} : vector<1x179xf32> to vector<1x160xf32>
    %17 = vector.extract_strided_slice %1 {offsets = [0, 15], sizes = [1, 160], strides = [1, 1]} : vector<1x179xf32> to vector<1x160xf32>
    %18 = vector.extract_strided_slice %1 {offsets = [0, 16], sizes = [1, 160], strides = [1, 1]} : vector<1x179xf32> to vector<1x160xf32>
    %19 = vector.extract_strided_slice %1 {offsets = [0, 17], sizes = [1, 160], strides = [1, 1]} : vector<1x179xf32> to vector<1x160xf32>
    %20 = vector.extract_strided_slice %1 {offsets = [0, 18], sizes = [1, 160], strides = [1, 1]} : vector<1x179xf32> to vector<1x160xf32>
    %21 = vector.extract_strided_slice %1 {offsets = [0, 19], sizes = [1, 160], strides = [1, 1]} : vector<1x179xf32> to vector<1x160xf32>
    %22 = tpu.concatenate %2, %3, %4, %5, %6, %7, %8, %9, %10, %11, %12, %13, %14, %15, %16, %17 in 0 : vector<1x160xf32>, vector<1x160xf32>, vector<1x160xf32>, vector<1x160xf32>, vector<1x160xf32>, vector<1x160xf32>, vector<1x160xf32>, vector<1x160xf32>, vector<1x160xf32>, vector<1x160xf32>, vector<1x160xf32>, vector<1x160xf32>, vector<1x160xf32>, vector<1x160xf32>, vector<1x160xf32>, vector<1x160xf32> -> vector<16x160xf32>
    %23 = tpu.concatenate %18, %19, %20, %21 in 0 : vector<1x160xf32>, vector<1x160xf32>, vector<1x160xf32>, vector<1x160xf32> -> vector<4x160xf32>
    %24 = tpu.concatenate %22, %23 in 0 : vector<16x160xf32>, vector<4x160xf32> -> vector<20x160xf32>
    %c0_2 = arith.constant 0 : index
    %c0_3 = arith.constant 0 : index
    %25 = vector.load %arg2[%c0_2, %c0_3] : memref<40x20xf32, #tpu.memory_space<vmem>>, vector<40x20xf32>
    %cst = arith.constant dense<0.000000e+00> : vector<40x160xf32>
    %26 = tpu.matmul %25, %24, %cst {dimension_numbers = #tpu.dot_dimension_numbers<[1], [0], [0], [1], [0, 0, 1, 1], [], []>} : vector<40x20xf32>, vector<20x160xf32>, vector<40x160xf32> -> vector<40x160xf32>
    %c0_4 = arith.constant 0 : index
    %c0_5 = arith.constant 0 : index
    %27 = vector.load %arg3[%c0_4, %c0_5] : memref<40x1xf32, #tpu.memory_space<vmem>>, vector<40x1xf32>
    %28 = vector.broadcast %27 : vector<40x1xf32> to vector<40x160xf32>
    %29 = arith.addf %26, %28 : vector<40x160xf32>
    %cst_6 = arith.constant 0.000000e+00 : f32
    %30 = vector.broadcast %cst_6 : f32 to vector<40x160xf32>
    %31 = arith.cmpf ogt, %29, %30 : vector<40x160xf32>
    %cst_7 = arith.constant 0.000000e+00 : f32
    %32 = vector.broadcast %cst_7 : f32 to vector<40x160xf32>
    %33 = arith.minimumf %29, %32 : vector<40x160xf32>
    %34 = math.exp %33 : vector<40x160xf32>
    %cst_8 = arith.constant 1.000000e+00 : f32
    %35 = vector.broadcast %cst_8 : f32 to vector<40x160xf32>
    %36 = arith.subf %34, %35 : vector<40x160xf32>
    %37 = arith.select %31, %29, %36 : vector<40x160xi1>, vector<40x160xf32>
    %38 = vector.extract_strided_slice %37 {offsets = [0, 0], sizes = [40, 146], strides = [1, 1]} : vector<40x160xf32> to vector<40x146xf32>
    %39 = vector.extract_strided_slice %37 {offsets = [0, 1], sizes = [40, 146], strides = [1, 1]} : vector<40x160xf32> to vector<40x146xf32>
    %40 = vector.extract_strided_slice %37 {offsets = [0, 2], sizes = [40, 146], strides = [1, 1]} : vector<40x160xf32> to vector<40x146xf32>
    %41 = vector.extract_strided_slice %37 {offsets = [0, 3], sizes = [40, 146], strides = [1, 1]} : vector<40x160xf32> to vector<40x146xf32>
    %42 = vector.extract_strided_slice %37 {offsets = [0, 4], sizes = [40, 146], strides = [1, 1]} : vector<40x160xf32> to vector<40x146xf32>
    %43 = vector.extract_strided_slice %37 {offsets = [0, 5], sizes = [40, 146], strides = [1, 1]} : vector<40x160xf32> to vector<40x146xf32>
    %44 = vector.extract_strided_slice %37 {offsets = [0, 6], sizes = [40, 146], strides = [1, 1]} : vector<40x160xf32> to vector<40x146xf32>
    %45 = vector.extract_strided_slice %37 {offsets = [0, 7], sizes = [40, 146], strides = [1, 1]} : vector<40x160xf32> to vector<40x146xf32>
    %46 = vector.extract_strided_slice %37 {offsets = [0, 8], sizes = [40, 146], strides = [1, 1]} : vector<40x160xf32> to vector<40x146xf32>
    %47 = vector.extract_strided_slice %37 {offsets = [0, 9], sizes = [40, 146], strides = [1, 1]} : vector<40x160xf32> to vector<40x146xf32>
    %48 = vector.extract_strided_slice %37 {offsets = [0, 10], sizes = [40, 146], strides = [1, 1]} : vector<40x160xf32> to vector<40x146xf32>
    %49 = vector.extract_strided_slice %37 {offsets = [0, 11], sizes = [40, 146], strides = [1, 1]} : vector<40x160xf32> to vector<40x146xf32>
    %50 = vector.extract_strided_slice %37 {offsets = [0, 12], sizes = [40, 146], strides = [1, 1]} : vector<40x160xf32> to vector<40x146xf32>
    %51 = vector.extract_strided_slice %37 {offsets = [0, 13], sizes = [40, 146], strides = [1, 1]} : vector<40x160xf32> to vector<40x146xf32>
    %52 = vector.extract_strided_slice %37 {offsets = [0, 14], sizes = [40, 146], strides = [1, 1]} : vector<40x160xf32> to vector<40x146xf32>
    %53 = tpu.concatenate %38, %39, %40, %41, %42, %43, %44, %45, %46, %47, %48, %49, %50, %51, %52 in 0 : vector<40x146xf32>, vector<40x146xf32>, vector<40x146xf32>, vector<40x146xf32>, vector<40x146xf32>, vector<40x146xf32>, vector<40x146xf32>, vector<40x146xf32>, vector<40x146xf32>, vector<40x146xf32>, vector<40x146xf32>, vector<40x146xf32>, vector<40x146xf32>, vector<40x146xf32>, vector<40x146xf32> -> vector<600x146xf32>
    %c0_9 = arith.constant 0 : index
    %c0_10 = arith.constant 0 : index
    %54 = vector.load %arg4[%c0_9, %c0_10] : memref<40x600xf32, #tpu.memory_space<vmem>>, vector<40x600xf32>
    %cst_11 = arith.constant dense<0.000000e+00> : vector<40x146xf32>
    %55 = tpu.matmul %54, %53, %cst_11 {dimension_numbers = #tpu.dot_dimension_numbers<[1], [0], [0], [1], [0, 0, 1, 1], [], []>} : vector<40x600xf32>, vector<600x146xf32>, vector<40x146xf32> -> vector<40x146xf32>
    %c0_12 = arith.constant 0 : index
    %c0_13 = arith.constant 0 : index
    %56 = vector.load %arg5[%c0_12, %c0_13] : memref<40x1xf32, #tpu.memory_space<vmem>>, vector<40x1xf32>
    %57 = vector.broadcast %56 : vector<40x1xf32> to vector<40x146xf32>
    %58 = arith.addf %55, %57 : vector<40x146xf32>
    %cst_14 = arith.constant 0.000000e+00 : f32
    %59 = vector.broadcast %cst_14 : f32 to vector<40x146xf32>
    %60 = arith.cmpf ogt, %58, %59 : vector<40x146xf32>
    %cst_15 = arith.constant 0.000000e+00 : f32
    %61 = vector.broadcast %cst_15 : f32 to vector<40x146xf32>
    %62 = arith.minimumf %58, %61 : vector<40x146xf32>
    %63 = math.exp %62 : vector<40x146xf32>
    %cst_16 = arith.constant 1.000000e+00 : f32
    %64 = vector.broadcast %cst_16 : f32 to vector<40x146xf32>
    %65 = arith.subf %63, %64 : vector<40x146xf32>
    %66 = arith.select %60, %58, %65 : vector<40x146xi1>, vector<40x146xf32>
    %c0_17 = arith.constant 0 : index
    %c0_18 = arith.constant 0 : index
    %67 = vector.load %arg8[%c0_17, %c0_18] : memref<146x6xf32, #tpu.memory_space<vmem>>, vector<146x6xf32>
    %cst_19 = arith.constant dense<0.000000e+00> : vector<40x6xf32>
    %68 = tpu.matmul %66, %67, %cst_19 {dimension_numbers = #tpu.dot_dimension_numbers<[1], [0], [0], [1], [0, 0, 1, 1], [], []>} : vector<40x146xf32>, vector<146x6xf32>, vector<40x6xf32> -> vector<40x6xf32>
    %c0_20 = arith.constant 0 : index
    %c0_21 = arith.constant 0 : index
    %69 = vector.load %arg6[%c0_20, %c0_21] : memref<40x40xf32, #tpu.memory_space<vmem>>, vector<40x40xf32>
    %cst_22 = arith.constant dense<0.000000e+00> : vector<40x6xf32>
    %70 = tpu.matmul %69, %68, %cst_22 {dimension_numbers = #tpu.dot_dimension_numbers<[1], [0], [0], [1], [0, 0, 1, 1], [], []>} : vector<40x40xf32>, vector<40x6xf32>, vector<40x6xf32> -> vector<40x6xf32>
    %c0_23 = arith.constant 0 : index
    %c0_24 = arith.constant 0 : index
    %71 = vector.load %arg7[%c0_23, %c0_24] : memref<40x1xf32, #tpu.memory_space<vmem>>, vector<40x1xf32>
    %72 = vector.broadcast %71 : vector<40x1xf32> to vector<40x6xf32>
    %73 = arith.addf %70, %72 : vector<40x6xf32>
    %c0_25 = arith.constant 0 : index
    %c0_26 = arith.constant 0 : index
    %c0_27 = arith.constant 0 : index
    %74 = vector.load %arg9[%c0_25, %c0_26, %c0_27] : memref<1x40x6xf32, #tpu.memory_space<vmem>>, vector<1x40x6xf32>
    %75 = vector.shape_cast %74 : vector<1x40x6xf32> to vector<40x6xf32>
    %76 = vector.shape_cast %73 : vector<40x6xf32> to vector<1x40x6xf32>
    tpu.vector_store %arg9[%c0_25, %c0_26, %c0_27], %76 {strides = array<i32>} : memref<1x40x6xf32, #tpu.memory_space<vmem>>, vector<1x40x6xf32>,
    return
  }
  func.func @transform_0(%arg0: i32) -> (i32, i32, i32) {
    %c0_i32 = arith.constant 0 : i32
    %c0_i32_0 = arith.constant 0 : i32
    %c0_i32_1 = arith.constant 0 : i32
    return %arg0, %c0_i32, %c0_i32_0 : i32, i32, i32
  }
  func.func @transform_1(%arg0: i32) -> (i32, i32) {
    %c0_i32 = arith.constant 0 : i32
    %c0_i32_0 = arith.constant 0 : i32
    %c0_i32_1 = arith.constant 0 : i32
    return %c0_i32, %c0_i32_0 : i32, i32
  }
  func.func @transform_2(%arg0: i32) -> (i32, i32) {
    %c0_i32 = arith.constant 0 : i32
    %c0_i32_0 = arith.constant 0 : i32
    %c0_i32_1 = arith.constant 0 : i32
    return %c0_i32, %c0_i32_0 : i32, i32
  }
  func.func @transform_3(%arg0: i32) -> (i32, i32) {
    %c0_i32 = arith.constant 0 : i32
    %c0_i32_0 = arith.constant 0 : i32
    %c0_i32_1 = arith.constant 0 : i32
    return %c0_i32, %c0_i32_0 : i32, i32
  }
  func.func @transform_4(%arg0: i32) -> (i32, i32) {
    %c0_i32 = arith.constant 0 : i32
    %c0_i32_0 = arith.constant 0 : i32
    %c0_i32_1 = arith.constant 0 : i32
    return %c0_i32, %c0_i32_0 : i32, i32
  }
  func.func @transform_5(%arg0: i32) -> (i32, i32) {
    %c0_i32 = arith.constant 0 : i32
    %c0_i32_0 = arith.constant 0 : i32
    %c0_i32_1 = arith.constant 0 : i32
    return %c0_i32, %c0_i32_0 : i32, i32
  }
  func.func @transform_6(%arg0: i32) -> (i32, i32) {
    %c0_i32 = arith.constant 0 : i32
    %c0_i32_0 = arith.constant 0 : i32
    %c0_i32_1 = arith.constant 0 : i32
    return %c0_i32, %c0_i32_0 : i32, i32
  }
  func.func @transform_7(%arg0: i32) -> (i32, i32) {
    %c0_i32 = arith.constant 0 : i32
    %c0_i32_0 = arith.constant 0 : i32
    %c0_i32_1 = arith.constant 0 : i32
    return %c0_i32, %c0_i32_0 : i32, i32
  }
  func.func @transform_8(%arg0: i32) -> (i32, i32, i32) {
    %c0_i32 = arith.constant 0 : i32
    %c0_i32_0 = arith.constant 0 : i32
    %c0_i32_1 = arith.constant 0 : i32
    return %arg0, %c0_i32, %c0_i32_0 : i32, i32, i32
  }
}

</mosaic_0001>

<llo_original>
// kernel: tpu_custom_call.1
$region0: #{tpu_custom_call.1}
  #allocation0 [shape = 'u32[]', space=smem, size = 0x4, offset = 0x4, fixed_abs, tag = 'smem constant byte address 0x4 - core index']
  #allocation1 [shape = 'u32[72,128]{1,0:T(1,128)}', space=vmem, size = 0x9000, scoped, tag = 'internal scratch']
  %s0 = inlined_call_operand.vmem [shape: f32[2,1,179], index: 0, kind: input, shape index: {}]
  %s1 = inlined_call_operand.vmem [shape: f32[40,20], index: 1, kind: input, shape index: {}]
  %s2 = inlined_call_operand.vmem [shape: f32[40,1], index: 2, kind: input, shape index: {}]
  %s3 = inlined_call_operand.hbm [shape: f32[40,600], index: 3, kind: input, shape index: {}]
  %s4 = inlined_call_operand.vmem [shape: f32[40,1], index: 4, kind: input, shape index: {}]
  %s5 = inlined_call_operand.vmem [shape: f32[40,40], index: 5, kind: input, shape index: {}]
  %s6 = inlined_call_operand.vmem [shape: f32[40,1], index: 6, kind: input, shape index: {}]
  %s7 = inlined_call_operand.vmem [shape: f32[146,6], index: 7, kind: input, shape index: {}]
  %s8 = inlined_call_operand.vmem [shape: f32[2,40,6], index: 8, kind: output, shape index: {}]
  %s9 = sld [smem:[#allocation0]]
  $region69: #{tpu_custom_call.1} parent=0
    _
  %s11 = ssub.s32 1, %s9
  %s12 = scalar_select 0, %s11, %s9
  $region1: #{tpu_custom_call.1} parent=0
    #allocation2 [shape = 'u8[102400]{0}', space=vmem, size = 0x19000, scoped, tag = 'input window, operand 3, single buffered']
    #allocation3 [shape = 's32[2]{0}', space=sflag, size = 0x8, scoped, tag = 'scoped memory for tpu_custom_call.1']
    %13 = vsyncpa [#allocation3], 0
    loop: start=0, step=1, limit=4
    $region2: #{tpu_custom_call.1} parent=1 // loop_pre_header
      _
    $region3: #{tpu_custom_call.1} parent=1 // loop_header
      %s15 = sphi 0, %s19
      %p16 = scmp.ge.s32.totalorder %s15, 4
      %s25 = sphi 0, %s27
      %s28 = sphi 0, %s25
      %s29 = sphi 0, %s28
      %s45 = sphi 0, %s29
      %s49 = sphi 0, %s49
      %s51 = sphi 0, %s49
      %s52 = sphi 0, %s51
      %s66 = sphi 0, %s52
      %s70 = sphi 0, %s70
      %s72 = sphi 0, %s70
      %s73 = sphi 0, %s72
      %s87 = sphi 0, %s73
      %s91 = sphi 0, %s91
      %s93 = sphi 0, %s91
      %s94 = sphi 0, %s93
      %s108 = sphi 0, %s94
      %s112 = sphi 0, %s112
      %s114 = sphi 0, %s112
      %s115 = sphi 0, %s114
      %s129 = sphi 0, %s115
      %s133 = sphi 0, %s133
      %s135 = sphi 0, %s133
      %s136 = sphi 0, %s135
      %s150 = sphi 0, %s136
      %s154 = sphi 0, %s154
      %s156 = sphi 0, %s154
      %s157 = sphi 0, %s156
      %s171 = sphi 0, %s157
      %s175 = sphi 0, %s175
      %s177 = sphi 0, %s175
      %s178 = sphi 0, %s177
      %s192 = sphi 0, %s178
      %s198 = sphi 0, %s200
      %s201 = sphi 0, %s198
      %s202 = sphi 0, %s201
      %s218 = sphi 0, %s202
    $region4: #{tpu_custom_call.1} parent=1 // loop_header_branch
      %18 = sbr.rel (%p16) target = $region8
    $region5: #{tpu_custom_call.1} parent=1 // loop_body
      %s20 = ssub.s32 %s15, 1
      %s21 = ssub.s32 %s15, 2
      %s22 = sadd.s32 %s15, 1
      %s23 = ssub.s32 %s15, %s22
      %p24 = scmp.eq.s32.totalorder %s23, 0
      %s26 = sadd.s32 %s25, 1
      %s27 = scalar_select %p24, %s25, %s26
      %p30 = pneg %p24
      %p31 = scmp.eq.s32.totalorder %s15, 1
      %p32 = por %p30, %p31
      %p33 = scmp.ne.s32.totalorder %s25, %s28
      %p34 = scmp.eq.s32.totalorder %s15, 0
      %p35 = por %p33, %p34
      %p36 = scmp.ne.s32.totalorder %s25, %s28
      %p37 = scmp.eq.s32.totalorder %s20, 1
      %p38 = por %p36, %p37
      %p39 = scmp.ne.s32.totalorder %s28, %s29
      %p40 = scmp.eq.s32.totalorder %s20, 0
      %p41 = por %p39, %p40
      %p42 = scmp.ne.s32.totalorder %s28, %s29
      %p43 = scmp.eq.s32.totalorder %s21, 1
      %p44 = por %p42, %p43
      %p46 = scmp.ne.s32.totalorder %s29, %s45
      %p47 = scmp.eq.s32.totalorder %s21, 0
      %p48 = por %p46, %p47
      %s50 = sadd.s32 %s49, 1
      %p53 = scmp.eq.s32.totalorder %s15, 1
      %p54 = scmp.ne.s32.totalorder %s49, %s51
      %p55 = scmp.eq.s32.totalorder %s15, 0
      %p56 = por %p54, %p55
      %p57 = scmp.ne.s32.totalorder %s49, %s51
      %p58 = scmp.eq.s32.totalorder %s20, 1
      %p59 = por %p57, %p58
      %p60 = scmp.ne.s32.totalorder %s51, %s52
      %p61 = scmp.eq.s32.totalorder %s20, 0
      %p62 = por %p60, %p61
      %p63 = scmp.ne.s32.totalorder %s51, %s52
      %p64 = scmp.eq.s32.totalorder %s21, 1
      %p65 = por %p63, %p64
      %p67 = scmp.ne.s32.totalorder %s52, %s66
      %p68 = scmp.eq.s32.totalorder %s21, 0
      %p69 = por %p67, %p68
      %s71 = sadd.s32 %s70, 1
      %p74 = scmp.eq.s32.totalorder %s15, 1
      %p75 = scmp.ne.s32.totalorder %s70, %s72
      %p76 = scmp.eq.s32.totalorder %s15, 0
      %p77 = por %p75, %p76
      %p78 = scmp.ne.s32.totalorder %s70, %s72
      %p79 = scmp.eq.s32.totalorder %s20, 1
      %p80 = por %p78, %p79
      %p81 = scmp.ne.s32.totalorder %s72, %s73
      %p82 = scmp.eq.s32.totalorder %s20, 0
      %p83 = por %p81, %p82
      %p84 = scmp.ne.s32.totalorder %s72, %s73
      %p85 = scmp.eq.s32.totalorder %s21, 1
      %p86 = por %p84, %p85
      %p88 = scmp.ne.s32.totalorder %s73, %s87
      %p89 = scmp.eq.s32.totalorder %s21, 0
      %p90 = por %p88, %p89
      %s92 = sadd.s32 %s91, 1
      %p95 = scmp.eq.s32.totalorder %s15, 1
      %p96 = scmp.ne.s32.totalorder %s91, %s93
      %p97 = scmp.eq.s32.totalorder %s15, 0
      %p98 = por %p96, %p97
      %p99 = scmp.ne.s32.totalorder %s91, %s93
      %p100 = scmp.eq.s32.totalorder %s20, 1
      %p101 = por %p99, %p100
      %p102 = scmp.ne.s32.totalorder %s93, %s94
      %p103 = scmp.eq.s32.totalorder %s20, 0
      %p104 = por %p102, %p103
      %p105 = scmp.ne.s32.totalorder %s93, %s94
      %p106 = scmp.eq.s32.totalorder %s21, 1
      %p107 = por %p105, %p106
      %p109 = scmp.ne.s32.totalorder %s94, %s108
      %p110 = scmp.eq.s32.totalorder %s21, 0
      %p111 = por %p109, %p110
      %s113 = sadd.s32 %s112, 1
      %p116 = scmp.eq.s32.totalorder %s15, 1
      %p117 = scmp.ne.s32.totalorder %s112, %s114
      %p118 = scmp.eq.s32.totalorder %s15, 0
      %p119 = por %p117, %p118
      %p120 = scmp.ne.s32.totalorder %s112, %s114
      %p121 = scmp.eq.s32.totalorder %s20, 1
      %p122 = por %p120, %p121
      %p123 = scmp.ne.s32.totalorder %s114, %s115
      %p124 = scmp.eq.s32.totalorder %s20, 0
      %p125 = por %p123, %p124
      %p126 = scmp.ne.s32.totalorder %s114, %s115
      %p127 = scmp.eq.s32.totalorder %s21, 1
      %p128 = por %p126, %p127
      %p130 = scmp.ne.s32.totalorder %s115, %s129
      %p131 = scmp.eq.s32.totalorder %s21, 0
      %p132 = por %p130, %p131
      %s134 = sadd.s32 %s133, 1
      %p137 = scmp.eq.s32.totalorder %s15, 1
      %p138 = scmp.ne.s32.totalorder %s133, %s135
      %p139 = scmp.eq.s32.totalorder %s15, 0
      %p140 = por %p138, %p139
      %p141 = scmp.ne.s32.totalorder %s133, %s135
      %p142 = scmp.eq.s32.totalorder %s20, 1
      %p143 = por %p141, %p142
      %p144 = scmp.ne.s32.totalorder %s135, %s136
      %p145 = scmp.eq.s32.totalorder %s20, 0
      %p146 = por %p144, %p145
      %p147 = scmp.ne.s32.totalorder %s135, %s136
      %p148 = scmp.eq.s32.totalorder %s21, 1
      %p149 = por %p147, %p148
      %p151 = scmp.ne.s32.totalorder %s136, %s150
      %p152 = scmp.eq.s32.totalorder %s21, 0
      %p153 = por %p151, %p152
      %s155 = sadd.s32 %s154, 1
      %p158 = scmp.eq.s32.totalorder %s15, 1
      %p159 = scmp.ne.s32.totalorder %s154, %s156
      %p160 = scmp.eq.s32.totalorder %s15, 0
      %p161 = por %p159, %p160
      %p162 = scmp.ne.s32.totalorder %s154, %s156
      %p163 = scmp.eq.s32.totalorder %s20, 1
      %p164 = por %p162, %p163
      %p165 = scmp.ne.s32.totalorder %s156, %s157
      %p166 = scmp.eq.s32.totalorder %s20, 0
      %p167 = por %p165, %p166
      %p168 = scmp.ne.s32.totalorder %s156, %s157
      %p169 = scmp.eq.s32.totalorder %s21, 1
      %p170 = por %p168, %p169
      %p172 = scmp.ne.s32.totalorder %s157, %s171
      %p173 = scmp.eq.s32.totalorder %s21, 0
      %p174 = por %p172, %p173
      %s176 = sadd.s32 %s175, 1
      %p179 = scmp.eq.s32.totalorder %s15, 1
      %p180 = scmp.ne.s32.totalorder %s175, %s177
      %p181 = scmp.eq.s32.totalorder %s15, 0
      %p182 = por %p180, %p181
      %p183 = scmp.ne.s32.totalorder %s175, %s177
      %p184 = scmp.eq.s32.totalorder %s20, 1
      %p185 = por %p183, %p184
      %p186 = scmp.ne.s32.totalorder %s177, %s178
      %p187 = scmp.eq.s32.totalorder %s20, 0
      %p188 = por %p186, %p187
      %p189 = scmp.ne.s32.totalorder %s177, %s178
      %p190 = scmp.eq.s32.totalorder %s21, 1
      %p191 = por %p189, %p190
      %p193 = scmp.ne.s32.totalorder %s178, %s192
      %p194 = scmp.eq.s32.totalorder %s21, 0
      %p195 = por %p193, %p194
      %s196 = ssub.s32 %s15, %s22
      %p197 = scmp.eq.s32.totalorder %s196, 0
      %s199 = sadd.s32 %s198, 1
      %s200 = scalar_select %p197, %s198, %s199
      %p203 = pneg %p197
      %p204 = scmp.eq.s32.totalorder %s15, 1
      %p205 = por %p203, %p204
      %p206 = scmp.ne.s32.totalorder %s198, %s201
      %p207 = scmp.eq.s32.totalorder %s15, 0
      %p208 = por %p206, %p207
      %p209 = scmp.ne.s32.totalorder %s198, %s201
      %p210 = scmp.eq.s32.totalorder %s20, 1
      %p211 = por %p209, %p210
      %p212 = scmp.ne.s32.totalorder %s201, %s202
      %p213 = scmp.eq.s32.totalorder %s20, 0
      %p214 = por %p212, %p213
      %p215 = scmp.ne.s32.totalorder %s201, %s202
      %p216 = scmp.eq.s32.totalorder %s21, 1
      %p217 = por %p215, %p216
      %p219 = scmp.ne.s32.totalorder %s202, %s218
      %p220 = scmp.eq.s32.totalorder %s21, 0
      %p221 = por %p219, %p220
      %p222 = scmp.le.s32.totalorder 1, %s15
      %p223 = scmp.lt.s32.totalorder %s15, 3
      %p224 = pnand %p222, %p223
      %p225 = pneg %p224
      // Predicated region
      $region9: #{tpu_custom_call.1} parent=5 // pred_check
        _
      $region10: #{tpu_custom_call.1} parent=5 // pred_check_branch
        %227 = sbr.rel (%p224) target = $region12
      $region11: #{tpu_custom_call.1} parent=5 // pred_region
        %s228 = ssub.s32 %s15, 1
        // Predicated region
        $region13: #{tpu_custom_call.1} parent=11 // pred_check
          %p229 = pneg %p62
        $region14: #{tpu_custom_call.1} parent=11 // pred_check_branch
          %231 = sbr.rel (%p229) target = $region16
        $region15: #{tpu_custom_call.1} parent=11 // pred_region
          _
        $region16: #{tpu_custom_call.1} parent=11 // pred_fallthru
          _
        // Predicated region
        $region17: #{tpu_custom_call.1} parent=11 // pred_check
          %p232 = pneg %p83
        $region18: #{tpu_custom_call.1} parent=11 // pred_check_branch
          %234 = sbr.rel (%p232) target = $region20
        $region19: #{tpu_custom_call.1} parent=11 // pred_region
          _
        $region20: #{tpu_custom_call.1} parent=11 // pred_fallthru
          _
        // Predicated region
        $region21: #{tpu_custom_call.1} parent=11 // pred_check
          %p235 = pneg %p104
        $region22: #{tpu_custom_call.1} parent=11 // pred_check_branch
          %237 = sbr.rel (%p235) target = $region24
        $region23: #{tpu_custom_call.1} parent=11 // pred_region
          %239 = vsyncadd [#allocation3], 0
          %s240 = sshll.u32 %s3, 4
          %s241 = int_to_ptr.hbm [resolvable:$true] %s240
          %s242 = sshll.u32 [#allocation2], 4
          %s243 = int_to_ptr.vmem [resolvable:$true] %s242
          %248 = dma.hbm_to_vmem [thread:$0]  %s241, 3200, %s243, [#allocation3], 640, 640, 40
        $region24: #{tpu_custom_call.1} parent=11 // pred_fallthru
          _
        // Predicated region
        $region25: #{tpu_custom_call.1} parent=11 // pred_check
          %p249 = pneg %p125
        $region26: #{tpu_custom_call.1} parent=11 // pred_check_branch
          %251 = sbr.rel (%p249) target = $region28
        $region27: #{tpu_custom_call.1} parent=11 // pred_region
          _
        $region28: #{tpu_custom_call.1} parent=11 // pred_fallthru
          _
        // Predicated region
        $region29: #{tpu_custom_call.1} parent=11 // pred_check
          %p252 = pneg %p146
        $region30: #{tpu_custom_call.1} parent=11 // pred_check_branch
          %254 = sbr.rel (%p252) target = $region32
        $region31: #{tpu_custom_call.1} parent=11 // pred_region
          _
        $region32: #{tpu_custom_call.1} parent=11 // pred_fallthru
          _
        // Predicated region
        $region33: #{tpu_custom_call.1} parent=11 // pred_check
          %p255 = pneg %p167
        $region34: #{tpu_custom_call.1} parent=11 // pred_check_branch
          %257 = sbr.rel (%p255) target = $region36
        $region35: #{tpu_custom_call.1} parent=11 // pred_region
          _
        $region36: #{tpu_custom_call.1} parent=11 // pred_fallthru
          _
        // Predicated region
        $region37: #{tpu_custom_call.1} parent=11 // pred_check
          %p258 = pneg %p188
        $region38: #{tpu_custom_call.1} parent=11 // pred_check_branch
          %260 = sbr.rel (%p258) target = $region40
        $region39: #{tpu_custom_call.1} parent=11 // pred_region
          _
        $region40: #{tpu_custom_call.1} parent=11 // pred_fallthru
          _
      $region12: #{tpu_custom_call.1} parent=5 // pred_fallthru
        _
      %p261 = scmp.lt.s32.totalorder %s15, 2
      // Predicated region
      $region41: #{tpu_custom_call.1} parent=5 // pred_check
        %p262 = pneg %p261
      $region42: #{tpu_custom_call.1} parent=5 // pred_check_branch
        %264 = sbr.rel (%p262) target = $region44
      $region43: #{tpu_custom_call.1} parent=5 // pred_region
        // Predicated region
        $region45: #{tpu_custom_call.1} parent=43 // pred_check
          %p265 = pneg %p35
        $region46: #{tpu_custom_call.1} parent=43 // pred_check_branch
          %267 = sbr.rel (%p265) target = $region48
        $region47: #{tpu_custom_call.1} parent=43 // pred_region
          %p268 = scmp.lt.s32.totalorder %s15, 1
          %s269 = scalar_select %p268, %s15, 1
          %s270 = smul.addr %s269, 2
          %s271 = scalar_lea.vmem %s0, %s270
        $region48: #{tpu_custom_call.1} parent=43 // pred_fallthru
          _
      $region44: #{tpu_custom_call.1} parent=5 // pred_fallthru
        _
      %p272 = scmp.le.s32.totalorder 1, %s15
      %p273 = scmp.lt.s32.totalorder %s15, 3
      %p274 = pnand %p272, %p273
      %p275 = pneg %p274
      // Predicated region
      $region49: #{tpu_custom_call.1} parent=5 // pred_check
        _
      $region50: #{tpu_custom_call.1} parent=5 // pred_check_branch
        %277 = sbr.rel (%p274) target = $region52
      $region51: #{tpu_custom_call.1} parent=5 // pred_region
        %s278 = ssub.s32 %s15, 1
        // Predicated region
        $region53: #{tpu_custom_call.1} parent=51 // pred_check
          %p279 = pneg %p104
        $region54: #{tpu_custom_call.1} parent=51 // pred_check_branch
          %281 = sbr.rel (%p279) target = $region56
        $region55: #{tpu_custom_call.1} parent=51 // pred_region
          %283 = dma.done [#allocation3], 3200
        $region56: #{tpu_custom_call.1} parent=51 // pred_fallthru
          _
        %p284 = scmp.lt.s32.totalorder %s20, 1
        %s285 = scalar_select %p284, %s20, 1
        %s286 = smul.addr %s285, 2
        %s287 = scalar_lea.vmem %s0, %s286
        %p288 = pneg %p41
        %p289 = pneg %p38
        %p290 = pneg %p62
        %p291 = pneg %p59
        %p292 = pneg %p83
        %p293 = pneg %p80
        %p294 = pneg %p104
        %p295 = pneg %p101
        %p296 = pneg %p125
        %p297 = pneg %p122
        %p298 = pneg %p146
        %p299 = pneg %p143
        %p300 = pneg %p167
        %p301 = pneg %p164
        %p302 = pneg %p188
        %p303 = pneg %p185
        %p304 = pneg %p214
        %p305 = pneg %p211
        %p306 = scmp.lt.s32.totalorder %s20, 1
        %s307 = scalar_select %p306, %s20, 1
        %s308 = smul.addr %s307, 5
        %s309 = smul.addr %s308, 8
        %s310 = scalar_lea.vmem %s8, %s309
        %p311 = scmp.lt.s32.totalorder %s20, 1
        %s312 = scalar_select %p311, %s20, 1
        %s313 = smul.addr %s312, 2
        %s314 = scalar_lea.vmem %s0, %s313
        %p315 = scmp.lt.s32.totalorder %s20, 1
        %s316 = scalar_select %p315, %s20, 1
        %s317 = smul.addr %s316, 5
        %s318 = smul.addr %s317, 8
        %s319 = scalar_lea.vmem %s8, %s318
        %v320 = vld [vmem:[%s314] sm:$0x3]
        %v322 = vperm.slane %v320, 0
        %v323 = vperm.slane %v320, 1
        %326 = vrot.lane.b32.xlu0 %v322, 127
        %v327 = vpop.permute.xlu0 %326
        %328 = vrot.lane.b32.xlu0 %v323, 127
        %v329 = vpop.permute.xlu0 %328
        %vm330 = vcmask 1039360
        %v331 = vsel %vm330, %v327, %v329
        %334 = vrot.lane.b32.xlu0 %v322, 126
        %v335 = vpop.permute.xlu0 %334
        %336 = vrot.lane.b32.xlu0 %v323, 126
        %v337 = vpop.permute.xlu0 %336
        %vm338 = vcmask 1031168
        %v339 = vsel %vm338, %v335, %v337
        %342 = vrot.lane.b32.xlu0 %v322, 125
        %v343 = vpop.permute.xlu0 %342
        %344 = vrot.lane.b32.xlu0 %v323, 125
        %v345 = vpop.permute.xlu0 %344
        %vm346 = vcmask 1022976
        %v347 = vsel %vm346, %v343, %v345
        %350 = vrot.lane.b32.xlu0 %v322, 124
        %v351 = vpop.permute.xlu0 %350
        %352 = vrot.lane.b32.xlu0 %v323, 124
        %v353 = vpop.permute.xlu0 %352
        %vm354 = vcmask 1014784
        %v355 = vsel %vm354, %v351, %v353
        %358 = vrot.lane.b32.xlu0 %v322, 123
        %v359 = vpop.permute.xlu0 %358
        %360 = vrot.lane.b32.xlu0 %v323, 123
        %v361 = vpop.permute.xlu0 %360
        %vm362 = vcmask 1006592
        %v363 = vsel %vm362, %v359, %v361
        %366 = vrot.lane.b32.xlu0 %v322, 122
        %v367 = vpop.permute.xlu0 %366
        %368 = vrot.lane.b32.xlu0 %v323, 122
        %v369 = vpop.permute.xlu0 %368
        %vm370 = vcmask 998400
        %v371 = vsel %vm370, %v367, %v369
        %374 = vrot.lane.b32.xlu0 %v322, 121
        %v375 = vpop.permute.xlu0 %374
        %376 = vrot.lane.b32.xlu0 %v323, 121
        %v377 = vpop.permute.xlu0 %376
        %vm378 = vcmask 990208
        %v379 = vsel %vm378, %v375, %v377
        %382 = vrot.lane.b32.xlu0 %v322, 120
        %v383 = vpop.permute.xlu0 %382
        %384 = vrot.lane.b32.xlu0 %v323, 120
        %v385 = vpop.permute.xlu0 %384
        %vm386 = vcmask 982016
        %v387 = vsel %vm386, %v383, %v385
        %390 = vrot.lane.b32.xlu0 %v322, 119
        %v391 = vpop.permute.xlu0 %390
        %392 = vrot.lane.b32.xlu0 %v323, 119
        %v393 = vpop.permute.xlu0 %392
        %vm394 = vcmask 973824
        %v395 = vsel %vm394, %v391, %v393
        %398 = vrot.lane.b32.xlu0 %v322, 118
        %v399 = vpop.permute.xlu0 %398
        %400 = vrot.lane.b32.xlu0 %v323, 118
        %v401 = vpop.permute.xlu0 %400
        %vm402 = vcmask 965632
        %v403 = vsel %vm402, %v399, %v401
        %406 = vrot.lane.b32.xlu0 %v322, 117
        %v407 = vpop.permute.xlu0 %406
        %408 = vrot.lane.b32.xlu0 %v323, 117
        %v409 = vpop.permute.xlu0 %408
        %vm410 = vcmask 957440
        %v411 = vsel %vm410, %v407, %v409
        %414 = vrot.lane.b32.xlu0 %v322, 116
        %v415 = vpop.permute.xlu0 %414
        %416 = vrot.lane.b32.xlu0 %v323, 116
        %v417 = vpop.permute.xlu0 %416
        %vm418 = vcmask 949248
        %v419 = vsel %vm418, %v415, %v417
        %422 = vrot.lane.b32.xlu0 %v322, 115
        %v423 = vpop.permute.xlu0 %422
        %424 = vrot.lane.b32.xlu0 %v323, 115
        %v425 = vpop.permute.xlu0 %424
        %vm426 = vcmask 941056
        %v427 = vsel %vm426, %v423, %v425
        %430 = vrot.lane.b32.xlu0 %v322, 114
        %v431 = vpop.permute.xlu0 %430
        %432 = vrot.lane.b32.xlu0 %v323, 114
        %v433 = vpop.permute.xlu0 %432
        %vm434 = vcmask 932864
        %v435 = vsel %vm434, %v431, %v433
        %438 = vrot.lane.b32.xlu0 %v322, 113
        %v439 = vpop.permute.xlu0 %438
        %440 = vrot.lane.b32.xlu0 %v323, 113
        %v441 = vpop.permute.xlu0 %440
        %vm442 = vcmask 924672
        %v443 = vsel %vm442, %v439, %v441
        %vm446 = vcmask 1040384
        %v447 = vsel %vm446, %v322, %v331
        %v448 = vsel %vm446, %v323, %v329
        %vm449 = vcmask 1041408
        %v450 = vsel %vm449, %v447, %v339
        %v451 = vsel %vm449, %v448, %v337
        %vm452 = vcmask 1042432
        %v453 = vsel %vm452, %v450, %v347
        %v454 = vsel %vm452, %v451, %v345
        %vm455 = vcmask 1043456
        %v456 = vsel %vm455, %v453, %v355
        %v457 = vsel %vm455, %v454, %v353
        %vm458 = vcmask 1044480
        %v459 = vsel %vm458, %v456, %v363
        %v460 = vsel %vm458, %v457, %v361
        %vm461 = vcmask 1045504
        %v462 = vsel %vm461, %v459, %v371
        %v463 = vsel %vm461, %v460, %v369
        %vm464 = vcmask 1046528
        %v465 = vsel %vm464, %v462, %v379
        %v466 = vsel %vm464, %v463, %v377
        %v467 = vsel %vm446, %v387, %v395
        %v468 = vsel %vm446, %v385, %v393
        %v469 = vsel %vm449, %v467, %v403
        %v470 = vsel %vm449, %v468, %v401
        %v471 = vsel %vm452, %v469, %v411
        %v472 = vsel %vm452, %v470, %v409
        %v473 = vsel %vm455, %v471, %v419
        %v474 = vsel %vm455, %v472, %v417
        %v475 = vsel %vm458, %v473, %v427
        %v476 = vsel %vm458, %v474, %v425
        %v477 = vsel %vm461, %v475, %v435
        %v478 = vsel %vm461, %v476, %v433
        %v479 = vsel %vm464, %v477, %v443
        %v480 = vsel %vm464, %v478, %v441
        %483 = vrot.lane.b32.xlu0 %v453, 112
        %v484 = vpop.permute.xlu0 %483
        %485 = vrot.lane.b32.xlu0 %v454, 112
        %v486 = vpop.permute.xlu0 %485
        %vm487 = vcmask 916480
        %v488 = vsel %vm487, %v484, %v486
        %v489 = vld [vmem:[%s1] sm:$0xff]
        %v490 = vld [vmem:[%s1 + $0x8] sm:$0xff]
        %v491 = vld [vmem:[%s1 + $0x10] sm:$0xff]
        %v492 = vld [vmem:[%s1 + $0x18] sm:$0xff]
        %v493 = vld [vmem:[%s1 + $0x20] sm:$0xff]
        %v494 = vld [vmem:[%s2] sm:$0xff]
        %v495 = vld [vmem:[%s2 + $0x8] sm:$0xff]
        %v496 = vld [vmem:[%s2 + $0x10] sm:$0xff]
        %v497 = vld [vmem:[%s2 + $0x18] sm:$0xff]
        %v498 = vld [vmem:[%s2 + $0x20] sm:$0xff]
        %500 = vset.pattern.permute.xlu0 0
        %501 = vperm.xlu0 %500, %v494
        %v502 = vpop.permute.xlu0 %501
        %505 = vset.pattern.permute.xlu0 0
        %506 = vperm.xlu0 %505, %v495
        %v507 = vpop.permute.xlu0 %506
        %510 = vset.pattern.permute.xlu0 0
        %511 = vperm.xlu0 %510, %v496
        %v512 = vpop.permute.xlu0 %511
        %515 = vset.pattern.permute.xlu0 0
        %516 = vperm.xlu0 %515, %v497
        %v517 = vpop.permute.xlu0 %516
        %520 = vset.pattern.permute.xlu0 0
        %521 = vperm.xlu0 %520, %v498
        %v522 = vpop.permute.xlu0 %521
        %vm524 = vcmask 162816
        %v526 = vsel %vm524, %v489, 0
        %v529 = vsel %vm524, %v490, 0
        %v532 = vsel %vm524, %v491, 0
        %v535 = vsel %vm524, %v492, 0
        %v538 = vsel %vm524, %v493, 0
        %v540 = vsel %vm455, %v488, 0
        %v542 = vsel %vm455, %v486, 0
        %544 = vmatpush.msra.mxu0 0.0
        %545 = vmatpush.msra.mxu0 0.0
        %546 = vmatpush.msra.mxu0 0.0
        %547 = vmatpush.msra.mxu0 0.0
        %548 = vmatpush.msra.mxu0 0.0
        %549 = vmatpush.msra.mxu0 0.0
        %550 = vmatpush.msra.mxu0 0.0
        %551 = vmatpush.msra.mxu0 0.0
        %552 = vmatpush.msra.mxu0 0.0
        %553 = vmatpush.msra.mxu0 0.0
        %554 = vmatpush.msra.mxu0 0.0
        %555 = vmatpush.msra.mxu0 0.0
        %556 = vmatpush.msra.mxu0 0.0
        %557 = vmatpush.msra.mxu0 %v540
        %558 = vmatpush.msra.mxu0 %v479
        %559 = vmatpush.msra.mxu0 %v465
        %560 = vmatmul.f32.gmra.mxu0 %v526
        %v561 = vpop.f32.mrf.mxu0
        %v562 = vadd.f32 %v502, %v561
        %563 = vmatmul.f32.gmra.mxu0 %v529
        %v564 = vpop.f32.mrf.mxu0
        %v565 = vadd.f32 %v507, %v564
        %566 = vmatmul.f32.gmra.mxu0 %v532
        %v567 = vpop.f32.mrf.mxu0
        %v568 = vadd.f32 %v512, %v567
        %569 = vmatmul.f32.gmra.mxu0 %v535
        %v570 = vpop.f32.mrf.mxu0
        %v571 = vadd.f32 %v517, %v570
        %572 = vmatmul.f32.gmra.mxu0 %v538
        %v573 = vpop.f32.mrf.mxu0
        %v574 = vadd.f32 %v522, %v573
        %575 = vdwg.mxu0
        %576 = vmatpush.msra.mxu0 0.0
        %577 = vmatpush.msra.mxu0 0.0
        %578 = vmatpush.msra.mxu0 0.0
        %579 = vmatpush.msra.mxu0 0.0
        %580 = vmatpush.msra.mxu0 0.0
        %581 = vmatpush.msra.mxu0 0.0
        %582 = vmatpush.msra.mxu0 0.0
        %583 = vmatpush.msra.mxu0 0.0
        %584 = vmatpush.msra.mxu0 0.0
        %585 = vmatpush.msra.mxu0 0.0
        %586 = vmatpush.msra.mxu0 0.0
        %587 = vmatpush.msra.mxu0 0.0
        %588 = vmatpush.msra.mxu0 0.0
        %589 = vmatpush.msra.mxu0 %v542
        %590 = vmatpush.msra.mxu0 %v480
        %591 = vmatpush.msra.mxu0 %v466
        %592 = vmatmul.f32.gmra.mxu0 %v526
        %v593 = vpop.f32.mrf.mxu0
        %v594 = vadd.f32 %v502, %v593
        %595 = vmatmul.f32.gmra.mxu0 %v529
        %v596 = vpop.f32.mrf.mxu0
        %v597 = vadd.f32 %v507, %v596
        %598 = vmatmul.f32.gmra.mxu0 %v532
        %v599 = vpop.f32.mrf.mxu0
        %v600 = vadd.f32 %v512, %v599
        %601 = vmatmul.f32.gmra.mxu0 %v535
        %v602 = vpop.f32.mrf.mxu0
        %v603 = vadd.f32 %v517, %v602
        %604 = vmatmul.f32.gmra.mxu0 %v538
        %v605 = vpop.f32.mrf.mxu0
        %v606 = vadd.f32 %v522, %v605
        %607 = vdwg.mxu0
        %vm608 = vcmp.gt.f32.partialorder %v562, 0.0
        %vm609 = vcmp.gt.f32.partialorder %v594, 0.0
        %vm610 = vcmp.gt.f32.partialorder %v565, 0.0
        %vm611 = vcmp.gt.f32.partialorder %v597, 0.0
        %vm612 = vcmp.gt.f32.partialorder %v568, 0.0
        %vm613 = vcmp.gt.f32.partialorder %v600, 0.0
        %vm614 = vcmp.gt.f32.partialorder %v571, 0.0
        %vm615 = vcmp.gt.f32.partialorder %v603, 0.0
        %vm616 = vcmp.gt.f32.partialorder %v574, 0.0
        %vm617 = vcmp.gt.f32.partialorder %v606, 0.0
        %v618 = vmin.f32 %v562, 0.0
        %v619 = vmin.f32 %v594, 0.0
        %v620 = vmin.f32 %v565, 0.0
        %v621 = vmin.f32 %v597, 0.0
        %v622 = vmin.f32 %v568, 0.0
        %v623 = vmin.f32 %v600, 0.0
        %v624 = vmin.f32 %v571, 0.0
        %v625 = vmin.f32 %v603, 0.0
        %v626 = vmin.f32 %v574, 0.0
        %v627 = vmin.f32 %v606, 0.0
        %v628 = vmul.f32 %v618, 1.442695
        %v629 = vpow.pop %v628
        %v630 = vmul.f32 %v619, 1.442695
        %v631 = vpow.pop %v630
        %v632 = vmul.f32 %v620, 1.442695
        %v633 = vpow.pop %v632
        %v634 = vmul.f32 %v621, 1.442695
        %v635 = vpow.pop %v634
        %v636 = vmul.f32 %v622, 1.442695
        %v637 = vpow.pop %v636
        %v638 = vmul.f32 %v623, 1.442695
        %v639 = vpow.pop %v638
        %v640 = vmul.f32 %v624, 1.442695
        %v641 = vpow.pop %v640
        %v642 = vmul.f32 %v625, 1.442695
        %v643 = vpow.pop %v642
        %v644 = vmul.f32 %v626, 1.442695
        %v645 = vpow.pop %v644
        %v646 = vmul.f32 %v627, 1.442695
        %v647 = vpow.pop %v646
        %v648 = vsub.f32 %v629, 1.0
        %v649 = vsub.f32 %v631, 1.0
        %v650 = vsub.f32 %v633, 1.0
        %v651 = vsub.f32 %v635, 1.0
        %v652 = vsub.f32 %v637, 1.0
        %v653 = vsub.f32 %v639, 1.0
        %v654 = vsub.f32 %v641, 1.0
        %v655 = vsub.f32 %v643, 1.0
        %v656 = vsub.f32 %v645, 1.0
        %v657 = vsub.f32 %v647, 1.0
        %v658 = vsel %vm608, %v562, %v648
        %v659 = vsel %vm609, %v594, %v649
        %v660 = vsel %vm610, %v565, %v650
        %v661 = vsel %vm611, %v597, %v651
        %v662 = vsel %vm612, %v568, %v652
        %v663 = vsel %vm613, %v600, %v653
        %v664 = vsel %vm614, %v571, %v654
        %v665 = vsel %vm615, %v603, %v655
        %v666 = vsel %vm616, %v574, %v656
        %v667 = vsel %vm617, %v606, %v657
        %678 = vrot.lane.b32.xlu0 %v658, 127
        %v679 = vpop.permute.xlu0 %678
        %680 = vrot.lane.b32.xlu0 %v659, 127
        %v681 = vpop.permute.xlu0 %680
        %682 = vrot.lane.b32.xlu0 %v660, 127
        %v683 = vpop.permute.xlu0 %682
        %684 = vrot.lane.b32.xlu0 %v661, 127
        %v685 = vpop.permute.xlu0 %684
        %686 = vrot.lane.b32.xlu0 %v662, 127
        %v687 = vpop.permute.xlu0 %686
        %688 = vrot.lane.b32.xlu0 %v663, 127
        %v689 = vpop.permute.xlu0 %688
        %690 = vrot.lane.b32.xlu0 %v664, 127
        %v691 = vpop.permute.xlu0 %690
        %692 = vrot.lane.b32.xlu0 %v665, 127
        %v693 = vpop.permute.xlu0 %692
        %694 = vrot.lane.b32.xlu0 %v666, 127
        %v695 = vpop.permute.xlu0 %694
        %696 = vrot.lane.b32.xlu0 %v667, 127
        %v697 = vpop.permute.xlu0 %696
        %v698 = vsel %vm330, %v679, %v681
        %v699 = vsel %vm330, %v683, %v685
        %v700 = vsel %vm330, %v687, %v689
        %v701 = vsel %vm330, %v691, %v693
        %v702 = vsel %vm330, %v695, %v697
        %713 = vrot.lane.b32.xlu0 %v658, 126
        %v714 = vpop.permute.xlu0 %713
        %715 = vrot.lane.b32.xlu0 %v659, 126
        %v716 = vpop.permute.xlu0 %715
        %717 = vrot.lane.b32.xlu0 %v660, 126
        %v718 = vpop.permute.xlu0 %717
        %719 = vrot.lane.b32.xlu0 %v661, 126
        %v720 = vpop.permute.xlu0 %719
        %721 = vrot.lane.b32.xlu0 %v662, 126
        %v722 = vpop.permute.xlu0 %721
        %723 = vrot.lane.b32.xlu0 %v663, 126
        %v724 = vpop.permute.xlu0 %723
        %725 = vrot.lane.b32.xlu0 %v664, 126
        %v726 = vpop.permute.xlu0 %725
        %727 = vrot.lane.b32.xlu0 %v665, 126
        %v728 = vpop.permute.xlu0 %727
        %729 = vrot.lane.b32.xlu0 %v666, 126
        %v730 = vpop.permute.xlu0 %729
        %731 = vrot.lane.b32.xlu0 %v667, 126
        %v732 = vpop.permute.xlu0 %731
        %v733 = vsel %vm338, %v714, %v716
        %v734 = vsel %vm338, %v718, %v720
        %v735 = vsel %vm338, %v722, %v724
        %v736 = vsel %vm338, %v726, %v728
        %v737 = vsel %vm338, %v730, %v732
        %748 = vrot.lane.b32.xlu0 %v658, 125
        %v749 = vpop.permute.xlu0 %748
        %750 = vrot.lane.b32.xlu0 %v659, 125
        %v751 = vpop.permute.xlu0 %750
        %752 = vrot.lane.b32.xlu0 %v660, 125
        %v753 = vpop.permute.xlu0 %752
        %754 = vrot.lane.b32.xlu0 %v661, 125
        %v755 = vpop.permute.xlu0 %754
        %756 = vrot.lane.b32.xlu0 %v662, 125
        %v757 = vpop.permute.xlu0 %756
        %758 = vrot.lane.b32.xlu0 %v663, 125
        %v759 = vpop.permute.xlu0 %758
        %760 = vrot.lane.b32.xlu0 %v664, 125
        %v761 = vpop.permute.xlu0 %760
        %762 = vrot.lane.b32.xlu0 %v665, 125
        %v763 = vpop.permute.xlu0 %762
        %764 = vrot.lane.b32.xlu0 %v666, 125
        %v765 = vpop.permute.xlu0 %764
        %766 = vrot.lane.b32.xlu0 %v667, 125
        %v767 = vpop.permute.xlu0 %766
        %v768 = vsel %vm346, %v749, %v751
        %v769 = vsel %vm346, %v753, %v755
        %v770 = vsel %vm346, %v757, %v759
        %v771 = vsel %vm346, %v761, %v763
        %v772 = vsel %vm346, %v765, %v767
        %783 = vrot.lane.b32.xlu0 %v658, 124
        %v784 = vpop.permute.xlu0 %783
        %785 = vrot.lane.b32.xlu0 %v659, 124
        %v786 = vpop.permute.xlu0 %785
        %787 = vrot.lane.b32.xlu0 %v660, 124
        %v788 = vpop.permute.xlu0 %787
        %789 = vrot.lane.b32.xlu0 %v661, 124
        %v790 = vpop.permute.xlu0 %789
        %791 = vrot.lane.b32.xlu0 %v662, 124
        %v792 = vpop.permute.xlu0 %791
        %793 = vrot.lane.b32.xlu0 %v663, 124
        %v794 = vpop.permute.xlu0 %793
        %795 = vrot.lane.b32.xlu0 %v664, 124
        %v796 = vpop.permute.xlu0 %795
        %797 = vrot.lane.b32.xlu0 %v665, 124
        %v798 = vpop.permute.xlu0 %797
        %799 = vrot.lane.b32.xlu0 %v666, 124
        %v800 = vpop.permute.xlu0 %799
        %801 = vrot.lane.b32.xlu0 %v667, 124
        %v802 = vpop.permute.xlu0 %801
        %v803 = vsel %vm354, %v784, %v786
        %v804 = vsel %vm354, %v788, %v790
        %v805 = vsel %vm354, %v792, %v794
        %v806 = vsel %vm354, %v796, %v798
        %v807 = vsel %vm354, %v800, %v802
        %818 = vrot.lane.b32.xlu0 %v658, 123
        %v819 = vpop.permute.xlu0 %818
        %820 = vrot.lane.b32.xlu0 %v659, 123
        %v821 = vpop.permute.xlu0 %820
        %822 = vrot.lane.b32.xlu0 %v660, 123
        %v823 = vpop.permute.xlu0 %822
        %824 = vrot.lane.b32.xlu0 %v661, 123
        %v825 = vpop.permute.xlu0 %824
        %826 = vrot.lane.b32.xlu0 %v662, 123
        %v827 = vpop.permute.xlu0 %826
        %828 = vrot.lane.b32.xlu0 %v663, 123
        %v829 = vpop.permute.xlu0 %828
        %830 = vrot.lane.b32.xlu0 %v664, 123
        %v831 = vpop.permute.xlu0 %830
        %832 = vrot.lane.b32.xlu0 %v665, 123
        %v833 = vpop.permute.xlu0 %832
        %834 = vrot.lane.b32.xlu0 %v666, 123
        %v835 = vpop.permute.xlu0 %834
        %836 = vrot.lane.b32.xlu0 %v667, 123
        %v837 = vpop.permute.xlu0 %836
        %v838 = vsel %vm362, %v819, %v821
        %v839 = vsel %vm362, %v823, %v825
        %v840 = vsel %vm362, %v827, %v829
        %v841 = vsel %vm362, %v831, %v833
        %v842 = vsel %vm362, %v835, %v837
        %853 = vrot.lane.b32.xlu0 %v658, 122
        %v854 = vpop.permute.xlu0 %853
        %855 = vrot.lane.b32.xlu0 %v659, 122
        %v856 = vpop.permute.xlu0 %855
        %857 = vrot.lane.b32.xlu0 %v660, 122
        %v858 = vpop.permute.xlu0 %857
        %859 = vrot.lane.b32.xlu0 %v661, 122
        %v860 = vpop.permute.xlu0 %859
        %861 = vrot.lane.b32.xlu0 %v662, 122
        %v862 = vpop.permute.xlu0 %861
        %863 = vrot.lane.b32.xlu0 %v663, 122
        %v864 = vpop.permute.xlu0 %863
        %865 = vrot.lane.b32.xlu0 %v664, 122
        %v866 = vpop.permute.xlu0 %865
        %867 = vrot.lane.b32.xlu0 %v665, 122
        %v868 = vpop.permute.xlu0 %867
        %869 = vrot.lane.b32.xlu0 %v666, 122
        %v870 = vpop.permute.xlu0 %869
        %871 = vrot.lane.b32.xlu0 %v667, 122
        %v872 = vpop.permute.xlu0 %871
        %v873 = vsel %vm370, %v854, %v856
        %v874 = vsel %vm370, %v858, %v860
        %v875 = vsel %vm370, %v862, %v864
        %v876 = vsel %vm370, %v866, %v868
        %v877 = vsel %vm370, %v870, %v872
        %888 = vrot.lane.b32.xlu0 %v658, 121
        %v889 = vpop.permute.xlu0 %888
        %890 = vrot.lane.b32.xlu0 %v659, 121
        %v891 = vpop.permute.xlu0 %890
        %892 = vrot.lane.b32.xlu0 %v660, 121
        %v893 = vpop.permute.xlu0 %892
        %894 = vrot.lane.b32.xlu0 %v661, 121
        %v895 = vpop.permute.xlu0 %894
        %896 = vrot.lane.b32.xlu0 %v662, 121
        %v897 = vpop.permute.xlu0 %896
        %898 = vrot.lane.b32.xlu0 %v663, 121
        %v899 = vpop.permute.xlu0 %898
        %900 = vrot.lane.b32.xlu0 %v664, 121
        %v901 = vpop.permute.xlu0 %900
        %902 = vrot.lane.b32.xlu0 %v665, 121
        %v903 = vpop.permute.xlu0 %902
        %904 = vrot.lane.b32.xlu0 %v666, 121
        %v905 = vpop.permute.xlu0 %904
        %906 = vrot.lane.b32.xlu0 %v667, 121
        %v907 = vpop.permute.xlu0 %906
        %v908 = vsel %vm378, %v889, %v891
        %v909 = vsel %vm378, %v893, %v895
        %v910 = vsel %vm378, %v897, %v899
        %v911 = vsel %vm378, %v901, %v903
        %v912 = vsel %vm378, %v905, %v907
        %923 = vrot.lane.b32.xlu0 %v658, 120
        %v924 = vpop.permute.xlu0 %923
        %925 = vrot.lane.b32.xlu0 %v659, 120
        %v926 = vpop.permute.xlu0 %925
        %927 = vrot.lane.b32.xlu0 %v660, 120
        %v928 = vpop.permute.xlu0 %927
        %929 = vrot.lane.b32.xlu0 %v661, 120
        %v930 = vpop.permute.xlu0 %929
        %931 = vrot.lane.b32.xlu0 %v662, 120
        %v932 = vpop.permute.xlu0 %931
        %933 = vrot.lane.b32.xlu0 %v663, 120
        %v934 = vpop.permute.xlu0 %933
        %935 = vrot.lane.b32.xlu0 %v664, 120
        %v936 = vpop.permute.xlu0 %935
        %937 = vrot.lane.b32.xlu0 %v665, 120
        %v938 = vpop.permute.xlu0 %937
        %939 = vrot.lane.b32.xlu0 %v666, 120
        %v940 = vpop.permute.xlu0 %939
        %941 = vrot.lane.b32.xlu0 %v667, 120
        %v942 = vpop.permute.xlu0 %941
        %v943 = vsel %vm386, %v924, %v926
        %v944 = vsel %vm386, %v928, %v930
        %v945 = vsel %vm386, %v932, %v934
        %v946 = vsel %vm386, %v936, %v938
        %v947 = vsel %vm386, %v940, %v942
        %958 = vrot.lane.b32.xlu0 %v658, 119
        %v959 = vpop.permute.xlu0 %958
        %960 = vrot.lane.b32.xlu0 %v659, 119
        %v961 = vpop.permute.xlu0 %960
        %962 = vrot.lane.b32.xlu0 %v660, 119
        %v963 = vpop.permute.xlu0 %962
        %964 = vrot.lane.b32.xlu0 %v661, 119
        %v965 = vpop.permute.xlu0 %964
        %966 = vrot.lane.b32.xlu0 %v662, 119
        %v967 = vpop.permute.xlu0 %966
        %968 = vrot.lane.b32.xlu0 %v663, 119
        %v969 = vpop.permute.xlu0 %968
        %970 = vrot.lane.b32.xlu0 %v664, 119
        %v971 = vpop.permute.xlu0 %970
        %972 = vrot.lane.b32.xlu0 %v665, 119
        %v973 = vpop.permute.xlu0 %972
        %974 = vrot.lane.b32.xlu0 %v666, 119
        %v975 = vpop.permute.xlu0 %974
        %976 = vrot.lane.b32.xlu0 %v667, 119
        %v977 = vpop.permute.xlu0 %976
        %v978 = vsel %vm394, %v959, %v961
        %v979 = vsel %vm394, %v963, %v965
        %v980 = vsel %vm394, %v967, %v969
        %v981 = vsel %vm394, %v971, %v973
        %v982 = vsel %vm394, %v975, %v977
        %993 = vrot.lane.b32.xlu0 %v658, 118
        %v994 = vpop.permute.xlu0 %993
        %995 = vrot.lane.b32.xlu0 %v659, 118
        %v996 = vpop.permute.xlu0 %995
        %997 = vrot.lane.b32.xlu0 %v660, 118
        %v998 = vpop.permute.xlu0 %997
        %999 = vrot.lane.b32.xlu0 %v661, 118
        %v1000 = vpop.permute.xlu0 %999
        %1001 = vrot.lane.b32.xlu0 %v662, 118
        %v1002 = vpop.permute.xlu0 %1001
        %1003 = vrot.lane.b32.xlu0 %v663, 118
        %v1004 = vpop.permute.xlu0 %1003
        %1005 = vrot.lane.b32.xlu0 %v664, 118
        %v1006 = vpop.permute.xlu0 %1005
        %1007 = vrot.lane.b32.xlu0 %v665, 118
        %v1008 = vpop.permute.xlu0 %1007
        %1009 = vrot.lane.b32.xlu0 %v666, 118
        %v1010 = vpop.permute.xlu0 %1009
        %1011 = vrot.lane.b32.xlu0 %v667, 118
        %v1012 = vpop.permute.xlu0 %1011
        %v1013 = vsel %vm402, %v994, %v996
        %v1014 = vsel %vm402, %v998, %v1000
        %v1015 = vsel %vm402, %v1002, %v1004
        %v1016 = vsel %vm402, %v1006, %v1008
        %v1017 = vsel %vm402, %v1010, %v1012
        %1028 = vrot.lane.b32.xlu0 %v658, 117
        %v1029 = vpop.permute.xlu0 %1028
        %1030 = vrot.lane.b32.xlu0 %v659, 117
        %v1031 = vpop.permute.xlu0 %1030
        %1032 = vrot.lane.b32.xlu0 %v660, 117
        %v1033 = vpop.permute.xlu0 %1032
        %1034 = vrot.lane.b32.xlu0 %v661, 117
        %v1035 = vpop.permute.xlu0 %1034
        %1036 = vrot.lane.b32.xlu0 %v662, 117
        %v1037 = vpop.permute.xlu0 %1036
        %1038 = vrot.lane.b32.xlu0 %v663, 117
        %v1039 = vpop.permute.xlu0 %1038
        %1040 = vrot.lane.b32.xlu0 %v664, 117
        %v1041 = vpop.permute.xlu0 %1040
        %1042 = vrot.lane.b32.xlu0 %v665, 117
        %v1043 = vpop.permute.xlu0 %1042
        %1044 = vrot.lane.b32.xlu0 %v666, 117
        %v1045 = vpop.permute.xlu0 %1044
        %1046 = vrot.lane.b32.xlu0 %v667, 117
        %v1047 = vpop.permute.xlu0 %1046
        %v1048 = vsel %vm410, %v1029, %v1031
        %v1049 = vsel %vm410, %v1033, %v1035
        %v1050 = vsel %vm410, %v1037, %v1039
        %v1051 = vsel %vm410, %v1041, %v1043
        %v1052 = vsel %vm410, %v1045, %v1047
        %1063 = vrot.lane.b32.xlu0 %v658, 116
        %v1064 = vpop.permute.xlu0 %1063
        %1065 = vrot.lane.b32.xlu0 %v659, 116
        %v1066 = vpop.permute.xlu0 %1065
        %1067 = vrot.lane.b32.xlu0 %v660, 116
        %v1068 = vpop.permute.xlu0 %1067
        %1069 = vrot.lane.b32.xlu0 %v661, 116
        %v1070 = vpop.permute.xlu0 %1069
        %1071 = vrot.lane.b32.xlu0 %v662, 116
        %v1072 = vpop.permute.xlu0 %1071
        %1073 = vrot.lane.b32.xlu0 %v663, 116
        %v1074 = vpop.permute.xlu0 %1073
        %1075 = vrot.lane.b32.xlu0 %v664, 116
        %v1076 = vpop.permute.xlu0 %1075
        %1077 = vrot.lane.b32.xlu0 %v665, 116
        %v1078 = vpop.permute.xlu0 %1077
        %1079 = vrot.lane.b32.xlu0 %v666, 116
        %v1080 = vpop.permute.xlu0 %1079
        %1081 = vrot.lane.b32.xlu0 %v667, 116
        %v1082 = vpop.permute.xlu0 %1081
        %v1083 = vsel %vm418, %v1064, %v1066
        %v1084 = vsel %vm418, %v1068, %v1070
        %v1085 = vsel %vm418, %v1072, %v1074
        %v1086 = vsel %vm418, %v1076, %v1078
        %v1087 = vsel %vm418, %v1080, %v1082
        %1098 = vrot.lane.b32.xlu0 %v658, 115
        %v1099 = vpop.permute.xlu0 %1098
        %1100 = vrot.lane.b32.xlu0 %v659, 115
        %v1101 = vpop.permute.xlu0 %1100
        %1102 = vrot.lane.b32.xlu0 %v660, 115
        %v1103 = vpop.permute.xlu0 %1102
        %1104 = vrot.lane.b32.xlu0 %v661, 115
        %v1105 = vpop.permute.xlu0 %1104
        %1106 = vrot.lane.b32.xlu0 %v662, 115
        %v1107 = vpop.permute.xlu0 %1106
        %1108 = vrot.lane.b32.xlu0 %v663, 115
        %v1109 = vpop.permute.xlu0 %1108
        %1110 = vrot.lane.b32.xlu0 %v664, 115
        %v1111 = vpop.permute.xlu0 %1110
        %1112 = vrot.lane.b32.xlu0 %v665, 115
        %v1113 = vpop.permute.xlu0 %1112
        %1114 = vrot.lane.b32.xlu0 %v666, 115
        %v1115 = vpop.permute.xlu0 %1114
        %1116 = vrot.lane.b32.xlu0 %v667, 115
        %v1117 = vpop.permute.xlu0 %1116
        %v1118 = vsel %vm426, %v1099, %v1101
        %v1119 = vsel %vm426, %v1103, %v1105
        %v1120 = vsel %vm426, %v1107, %v1109
        %v1121 = vsel %vm426, %v1111, %v1113
        %v1122 = vsel %vm426, %v1115, %v1117
        %1133 = vrot.lane.b32.xlu0 %v658, 114
        %v1134 = vpop.permute.xlu0 %1133
        %1135 = vrot.lane.b32.xlu0 %v659, 114
        %v1136 = vpop.permute.xlu0 %1135
        %1137 = vrot.lane.b32.xlu0 %v660, 114
        %v1138 = vpop.permute.xlu0 %1137
        %1139 = vrot.lane.b32.xlu0 %v661, 114
        %v1140 = vpop.permute.xlu0 %1139
        %1141 = vrot.lane.b32.xlu0 %v662, 114
        %v1142 = vpop.permute.xlu0 %1141
        %1143 = vrot.lane.b32.xlu0 %v663, 114
        %v1144 = vpop.permute.xlu0 %1143
        %1145 = vrot.lane.b32.xlu0 %v664, 114
        %v1146 = vpop.permute.xlu0 %1145
        %1147 = vrot.lane.b32.xlu0 %v665, 114
        %v1148 = vpop.permute.xlu0 %1147
        %1149 = vrot.lane.b32.xlu0 %v666, 114
        %v1150 = vpop.permute.xlu0 %1149
        %1151 = vrot.lane.b32.xlu0 %v667, 114
        %v1152 = vpop.permute.xlu0 %1151
        %v1153 = vsel %vm434, %v1134, %v1136
        %v1154 = vsel %vm434, %v1138, %v1140
        %v1155 = vsel %vm434, %v1142, %v1144
        %v1156 = vsel %vm434, %v1146, %v1148
        %v1157 = vsel %vm434, %v1150, %v1152
        %v1168 = vld [vmem:[#allocation2] sm:$0xff]
        %v1169 = vld [vmem:[#allocation2 + $0x8] sm:$0xff]
        %v1170 = vld [vmem:[#allocation2 + $0x10] sm:$0xff]
        %v1171 = vld [vmem:[#allocation2 + $0x18] sm:$0xff]
        %v1172 = vld [vmem:[#allocation2 + $0x20] sm:$0xff]
        %v1173 = vld [vmem:[#allocation2 + $0x28] sm:$0xff]
        %v1174 = vld [vmem:[#allocation2 + $0x30] sm:$0xff]
        %v1175 = vld [vmem:[#allocation2 + $0x38] sm:$0xff]
        %v1176 = vld [vmem:[#allocation2 + $0x40] sm:$0xff]
        %v1177 = vld [vmem:[#allocation2 + $0x48] sm:$0xff]
        %v1178 = vld [vmem:[#allocation2 + $0x50] sm:$0xff]
        %v1179 = vld [vmem:[#allocation2 + $0x58] sm:$0xff]
        %v1180 = vld [vmem:[#allocation2 + $0x60] sm:$0xff]
        %v1181 = vld [vmem:[#allocation2 + $0x68] sm:$0xff]
        %v1182 = vld [vmem:[#allocation2 + $0x70] sm:$0xff]
        %v1183 = vld [vmem:[#allocation2 + $0x78] sm:$0xff]
        %v1184 = vld [vmem:[#allocation2 + $0x80] sm:$0xff]
        %v1185 = vld [vmem:[#allocation2 + $0x88] sm:$0xff]
        %v1186 = vld [vmem:[#allocation2 + $0x90] sm:$0xff]
        %v1187 = vld [vmem:[#allocation2 + $0x98] sm:$0xff]
        %v1188 = vld [vmem:[#allocation2 + $0xa0] sm:$0xff]
        %v1189 = vld [vmem:[#allocation2 + $0xa8] sm:$0xff]
        %v1190 = vld [vmem:[#allocation2 + $0xb0] sm:$0xff]
        %v1191 = vld [vmem:[#allocation2 + $0xb8] sm:$0xff]
        %v1192 = vld [vmem:[#allocation2 + $0xc0] sm:$0xff]
        %v1193 = vld [vmem:[%s4] sm:$0xff]
        %v1194 = vld [vmem:[%s4 + $0x8] sm:$0xff]
        %v1195 = vld [vmem:[%s4 + $0x10] sm:$0xff]
        %v1196 = vld [vmem:[%s4 + $0x18] sm:$0xff]
        %v1197 = vld [vmem:[%s4 + $0x20] sm:$0xff]
        %1199 = vset.pattern.permute.xlu0 0
        %1200 = vperm.xlu0 %1199, %v1193
        %v1201 = vpop.permute.xlu0 %1200
        %1204 = vset.pattern.permute.xlu0 0
        %1205 = vperm.xlu0 %1204, %v1194
        %v1206 = vpop.permute.xlu0 %1205
        %1209 = vset.pattern.permute.xlu0 0
        %1210 = vperm.xlu0 %1209, %v1195
        %v1211 = vpop.permute.xlu0 %1210
        %1214 = vset.pattern.permute.xlu0 0
        %1215 = vperm.xlu0 %1214, %v1196
        %v1216 = vpop.permute.xlu0 %1215
        %1219 = vset.pattern.permute.xlu0 0
        %1220 = vperm.xlu0 %1219, %v1197
        %v1221 = vpop.permute.xlu0 %1220
        %vm1223 = vcmask 719872
        %v1225 = vsel %vm1223, %v1172, 0
        %v1228 = vsel %vm1223, %v1177, 0
        %v1231 = vsel %vm1223, %v1182, 0
        %v1234 = vsel %vm1223, %v1187, 0
        %v1237 = vsel %vm1223, %v1192, 0
        %1239 = vmatpush.msra.mxu0 %v768
        %1240 = vmatpush.msra.mxu0 %v737
        %1241 = vmatpush.msra.mxu0 %v736
        %1242 = vmatpush.msra.mxu0 %v735
        %1243 = vmatpush.msra.mxu0 %v734
        %1244 = vmatpush.msra.mxu0 %v733
        %1245 = vmatpush.msra.mxu0 %v702
        %1246 = vmatpush.msra.mxu0 %v701
        %1247 = vmatpush.msra.mxu0 %v700
        %1248 = vmatpush.msra.mxu0 %v699
        %1249 = vmatpush.msra.mxu0 %v698
        %1250 = vmatpush.msra.mxu0 %v666
        %1251 = vmatpush.msra.mxu0 %v664
        %1252 = vmatpush.msra.mxu0 %v662
        %1253 = vmatpush.msra.mxu0 %v660
        %1254 = vmatpush.msra.mxu0 %v658
        %1255 = vmatmul.f32.gmra.mxu0 %v1168
        %v1256 = vpop.f32.mrf.mxu0
        %v1257 = vadd.f32 %v1201, %v1256
        %1258 = vmatmul.f32.gmra.mxu0 %v1173
        %v1259 = vpop.f32.mrf.mxu0
        %v1260 = vadd.f32 %v1206, %v1259
        %1261 = vmatmul.f32.gmra.mxu0 %v1178
        %v1262 = vpop.f32.mrf.mxu0
        %v1263 = vadd.f32 %v1211, %v1262
        %1264 = vmatmul.f32.gmra.mxu0 %v1183
        %v1265 = vpop.f32.mrf.mxu0
        %v1266 = vadd.f32 %v1216, %v1265
        %1267 = vmatmul.f32.gmra.mxu0 %v1188
        %v1268 = vpop.f32.mrf.mxu0
        %v1269 = vadd.f32 %v1221, %v1268
        %1270 = vdwg.mxu0
        %1271 = vmatpush.msra.mxu0 %v874
        %1272 = vmatpush.msra.mxu0 %v873
        %1273 = vmatpush.msra.mxu0 %v842
        %1274 = vmatpush.msra.mxu0 %v841
        %1275 = vmatpush.msra.mxu0 %v840
        %1276 = vmatpush.msra.mxu0 %v839
        %1277 = vmatpush.msra.mxu0 %v838
        %1278 = vmatpush.msra.mxu0 %v807
        %1279 = vmatpush.msra.mxu0 %v806
        %1280 = vmatpush.msra.mxu0 %v805
        %1281 = vmatpush.msra.mxu0 %v804
        %1282 = vmatpush.msra.mxu0 %v803
        %1283 = vmatpush.msra.mxu0 %v772
        %1284 = vmatpush.msra.mxu0 %v771
        %1285 = vmatpush.msra.mxu0 %v770
        %1286 = vmatpush.msra.mxu0 %v769
        %1287 = vmatmul.f32.gmra.mxu0 %v1169
        %v1288 = vpop.f32.mrf.mxu0
        %v1289 = vadd.f32 %v1257, %v1288
        %1290 = vmatmul.f32.gmra.mxu0 %v1174
        %v1291 = vpop.f32.mrf.mxu0
        %v1292 = vadd.f32 %v1260, %v1291
        %1293 = vmatmul.f32.gmra.mxu0 %v1179
        %v1294 = vpop.f32.mrf.mxu0
        %v1295 = vadd.f32 %v1263, %v1294
        %1296 = vmatmul.f32.gmra.mxu0 %v1184
        %v1297 = vpop.f32.mrf.mxu0
        %v1298 = vadd.f32 %v1266, %v1297
        %1299 = vmatmul.f32.gmra.mxu0 %v1189
        %v1300 = vpop.f32.mrf.mxu0
        %v1301 = vadd.f32 %v1269, %v1300
        %1302 = vdwg.mxu0
        %1303 = vmatpush.msra.mxu0 %v980
        %1304 = vmatpush.msra.mxu0 %v979
        %1305 = vmatpush.msra.mxu0 %v978
        %1306 = vmatpush.msra.mxu0 %v947
        %1307 = vmatpush.msra.mxu0 %v946
        %1308 = vmatpush.msra.mxu0 %v945
        %1309 = vmatpush.msra.mxu0 %v944
        %1310 = vmatpush.msra.mxu0 %v943
        %1311 = vmatpush.msra.mxu0 %v912
        %1312 = vmatpush.msra.mxu0 %v911
        %1313 = vmatpush.msra.mxu0 %v910
        %1314 = vmatpush.msra.mxu0 %v909
        %1315 = vmatpush.msra.mxu0 %v908
        %1316 = vmatpush.msra.mxu0 %v877
        %1317 = vmatpush.msra.mxu0 %v876
        %1318 = vmatpush.msra.mxu0 %v875
        %1319 = vmatmul.f32.gmra.mxu0 %v1170
        %v1320 = vpop.f32.mrf.mxu0
        %v1321 = vadd.f32 %v1289, %v1320
        %1322 = vmatmul.f32.gmra.mxu0 %v1175
        %v1323 = vpop.f32.mrf.mxu0
        %v1324 = vadd.f32 %v1292, %v1323
        %1325 = vmatmul.f32.gmra.mxu0 %v1180
        %v1326 = vpop.f32.mrf.mxu0
        %v1327 = vadd.f32 %v1295, %v1326
        %1328 = vmatmul.f32.gmra.mxu0 %v1185
        %v1329 = vpop.f32.mrf.mxu0
        %v1330 = vadd.f32 %v1298, %v1329
        %1331 = vmatmul.f32.gmra.mxu0 %v1190
        %v1332 = vpop.f32.mrf.mxu0
        %v1333 = vadd.f32 %v1301, %v1332
        %1334 = vdwg.mxu0
        %1335 = vmatpush.msra.mxu0 %v1086
        %1336 = vmatpush.msra.mxu0 %v1085
        %1337 = vmatpush.msra.mxu0 %v1084
        %1338 = vmatpush.msra.mxu0 %v1083
        %1339 = vmatpush.msra.mxu0 %v1052
        %1340 = vmatpush.msra.mxu0 %v1051
        %1341 = vmatpush.msra.mxu0 %v1050
        %1342 = vmatpush.msra.mxu0 %v1049
        %1343 = vmatpush.msra.mxu0 %v1048
        %1344 = vmatpush.msra.mxu0 %v1017
        %1345 = vmatpush.msra.mxu0 %v1016
        %1346 = vmatpush.msra.mxu0 %v1015
        %1347 = vmatpush.msra.mxu0 %v1014
        %1348 = vmatpush.msra.mxu0 %v1013
        %1349 = vmatpush.msra.mxu0 %v982
        %1350 = vmatpush.msra.mxu0 %v981
        %1351 = vmatmul.f32.gmra.mxu0 %v1171
        %v1352 = vpop.f32.mrf.mxu0
        %v1353 = vadd.f32 %v1321, %v1352
        %1354 = vmatmul.f32.gmra.mxu0 %v1176
        %v1355 = vpop.f32.mrf.mxu0
        %v1356 = vadd.f32 %v1324, %v1355
        %1357 = vmatmul.f32.gmra.mxu0 %v1181
        %v1358 = vpop.f32.mrf.mxu0
        %v1359 = vadd.f32 %v1327, %v1358
        %1360 = vmatmul.f32.gmra.mxu0 %v1186
        %v1361 = vpop.f32.mrf.mxu0
        %v1362 = vadd.f32 %v1330, %v1361
        %1363 = vmatmul.f32.gmra.mxu0 %v1191
        %v1364 = vpop.f32.mrf.mxu0
        %v1365 = vadd.f32 %v1333, %v1364
        %1366 = vdwg.mxu0
        %1367 = vmatpush.msra.mxu0 0.0
        %1368 = vmatpush.msra.mxu0 0.0
        %1369 = vmatpush.msra.mxu0 0.0
        %1370 = vmatpush.msra.mxu0 0.0
        %1371 = vmatpush.msra.mxu0 0.0
        %1372 = vmatpush.msra.mxu0 %v1157
        %1373 = vmatpush.msra.mxu0 %v1156
        %1374 = vmatpush.msra.mxu0 %v1155
        %1375 = vmatpush.msra.mxu0 %v1154
        %1376 = vmatpush.msra.mxu0 %v1153
        %1377 = vmatpush.msra.mxu0 %v1122
        %1378 = vmatpush.msra.mxu0 %v1121
        %1379 = vmatpush.msra.mxu0 %v1120
        %1380 = vmatpush.msra.mxu0 %v1119
        %1381 = vmatpush.msra.mxu0 %v1118
        %1382 = vmatpush.msra.mxu0 %v1087
        %1383 = vmatmul.f32.gmra.mxu0 %v1225
        %v1384 = vpop.f32.mrf.mxu0
        %v1385 = vadd.f32 %v1353, %v1384
        %1386 = vmatmul.f32.gmra.mxu0 %v1228
        %v1387 = vpop.f32.mrf.mxu0
        %v1388 = vadd.f32 %v1356, %v1387
        %1389 = vmatmul.f32.gmra.mxu0 %v1231
        %v1390 = vpop.f32.mrf.mxu0
        %v1391 = vadd.f32 %v1359, %v1390
        %1392 = vmatmul.f32.gmra.mxu0 %v1234
        %v1393 = vpop.f32.mrf.mxu0
        %v1394 = vadd.f32 %v1362, %v1393
        %1395 = vmatmul.f32.gmra.mxu0 %v1237
        %v1396 = vpop.f32.mrf.mxu0
        %v1397 = vadd.f32 %v1365, %v1396
        %1398 = vdwg.mxu0
        %1399 = vmatpush.msra.mxu0 %v751
        %1400 = vmatpush.msra.mxu0 %v732
        %1401 = vmatpush.msra.mxu0 %v728
        %1402 = vmatpush.msra.mxu0 %v724
        %1403 = vmatpush.msra.mxu0 %v720
        %1404 = vmatpush.msra.mxu0 %v716
        %1405 = vmatpush.msra.mxu0 %v697
        %1406 = vmatpush.msra.mxu0 %v693
        %1407 = vmatpush.msra.mxu0 %v689
        %1408 = vmatpush.msra.mxu0 %v685
        %1409 = vmatpush.msra.mxu0 %v681
        %1410 = vmatpush.msra.mxu0 %v667
        %1411 = vmatpush.msra.mxu0 %v665
        %1412 = vmatpush.msra.mxu0 %v663
        %1413 = vmatpush.msra.mxu0 %v661
        %1414 = vmatpush.msra.mxu0 %v659
        %1415 = vmatmul.f32.gmra.mxu0 %v1168
        %v1416 = vpop.f32.mrf.mxu0
        %v1417 = vadd.f32 %v1201, %v1416
        %1418 = vmatmul.f32.gmra.mxu0 %v1173
        %v1419 = vpop.f32.mrf.mxu0
        %v1420 = vadd.f32 %v1206, %v1419
        %1421 = vmatmul.f32.gmra.mxu0 %v1178
        %v1422 = vpop.f32.mrf.mxu0
        %v1423 = vadd.f32 %v1211, %v1422
        %1424 = vmatmul.f32.gmra.mxu0 %v1183
        %v1425 = vpop.f32.mrf.mxu0
        %v1426 = vadd.f32 %v1216, %v1425
        %1427 = vmatmul.f32.gmra.mxu0 %v1188
        %v1428 = vpop.f32.mrf.mxu0
        %v1429 = vadd.f32 %v1221, %v1428
        %1430 = vdwg.mxu0
        %1431 = vmatpush.msra.mxu0 %v860
        %1432 = vmatpush.msra.mxu0 %v856
        %1433 = vmatpush.msra.mxu0 %v837
        %1434 = vmatpush.msra.mxu0 %v833
        %1435 = vmatpush.msra.mxu0 %v829
        %1436 = vmatpush.msra.mxu0 %v825
        %1437 = vmatpush.msra.mxu0 %v821
        %1438 = vmatpush.msra.mxu0 %v802
        %1439 = vmatpush.msra.mxu0 %v798
        %1440 = vmatpush.msra.mxu0 %v794
        %1441 = vmatpush.msra.mxu0 %v790
        %1442 = vmatpush.msra.mxu0 %v786
        %1443 = vmatpush.msra.mxu0 %v767
        %1444 = vmatpush.msra.mxu0 %v763
        %1445 = vmatpush.msra.mxu0 %v759
        %1446 = vmatpush.msra.mxu0 %v755
        %1447 = vmatmul.f32.gmra.mxu0 %v1169
        %v1448 = vpop.f32.mrf.mxu0
        %v1449 = vadd.f32 %v1417, %v1448
        %1450 = vmatmul.f32.gmra.mxu0 %v1174
        %v1451 = vpop.f32.mrf.mxu0
        %v1452 = vadd.f32 %v1420, %v1451
        %1453 = vmatmul.f32.gmra.mxu0 %v1179
        %v1454 = vpop.f32.mrf.mxu0
        %v1455 = vadd.f32 %v1423, %v1454
        %1456 = vmatmul.f32.gmra.mxu0 %v1184
        %v1457 = vpop.f32.mrf.mxu0
        %v1458 = vadd.f32 %v1426, %v1457
        %1459 = vmatmul.f32.gmra.mxu0 %v1189
        %v1460 = vpop.f32.mrf.mxu0
        %v1461 = vadd.f32 %v1429, %v1460
        %1462 = vdwg.mxu0
        %1463 = vmatpush.msra.mxu0 %v969
        %1464 = vmatpush.msra.mxu0 %v965
        %1465 = vmatpush.msra.mxu0 %v961
        %1466 = vmatpush.msra.mxu0 %v942
        %1467 = vmatpush.msra.mxu0 %v938
        %1468 = vmatpush.msra.mxu0 %v934
        %1469 = vmatpush.msra.mxu0 %v930
        %1470 = vmatpush.msra.mxu0 %v926
        %1471 = vmatpush.msra.mxu0 %v907
        %1472 = vmatpush.msra.mxu0 %v903
        %1473 = vmatpush.msra.mxu0 %v899
        %1474 = vmatpush.msra.mxu0 %v895
        %1475 = vmatpush.msra.mxu0 %v891
        %1476 = vmatpush.msra.mxu0 %v872
        %1477 = vmatpush.msra.mxu0 %v868
        %1478 = vmatpush.msra.mxu0 %v864
        %1479 = vmatmul.f32.gmra.mxu0 %v1170
        %v1480 = vpop.f32.mrf.mxu0
        %v1481 = vadd.f32 %v1449, %v1480
        %1482 = vmatmul.f32.gmra.mxu0 %v1175
        %v1483 = vpop.f32.mrf.mxu0
        %v1484 = vadd.f32 %v1452, %v1483
        %1485 = vmatmul.f32.gmra.mxu0 %v1180
        %v1486 = vpop.f32.mrf.mxu0
        %v1487 = vadd.f32 %v1455, %v1486
        %1488 = vmatmul.f32.gmra.mxu0 %v1185
        %v1489 = vpop.f32.mrf.mxu0
        %v1490 = vadd.f32 %v1458, %v1489
        %1491 = vmatmul.f32.gmra.mxu0 %v1190
        %v1492 = vpop.f32.mrf.mxu0
        %v1493 = vadd.f32 %v1461, %v1492
        %1494 = vdwg.mxu0
        %1495 = vmatpush.msra.mxu0 %v1078
        %1496 = vmatpush.msra.mxu0 %v1074
        %1497 = vmatpush.msra.mxu0 %v1070
        %1498 = vmatpush.msra.mxu0 %v1066
        %1499 = vmatpush.msra.mxu0 %v1047
        %1500 = vmatpush.msra.mxu0 %v1043
        %1501 = vmatpush.msra.mxu0 %v1039
        %1502 = vmatpush.msra.mxu0 %v1035
        %1503 = vmatpush.msra.mxu0 %v1031
        %1504 = vmatpush.msra.mxu0 %v1012
        %1505 = vmatpush.msra.mxu0 %v1008
        %1506 = vmatpush.msra.mxu0 %v1004
        %1507 = vmatpush.msra.mxu0 %v1000
        %1508 = vmatpush.msra.mxu0 %v996
        %1509 = vmatpush.msra.mxu0 %v977
        %1510 = vmatpush.msra.mxu0 %v973
        %1511 = vmatmul.f32.gmra.mxu0 %v1171
        %v1512 = vpop.f32.mrf.mxu0
        %v1513 = vadd.f32 %v1481, %v1512
        %1514 = vmatmul.f32.gmra.mxu0 %v1176
        %v1515 = vpop.f32.mrf.mxu0
        %v1516 = vadd.f32 %v1484, %v1515
        %1517 = vmatmul.f32.gmra.mxu0 %v1181
        %v1518 = vpop.f32.mrf.mxu0
        %v1519 = vadd.f32 %v1487, %v1518
        %1520 = vmatmul.f32.gmra.mxu0 %v1186
        %v1521 = vpop.f32.mrf.mxu0
        %v1522 = vadd.f32 %v1490, %v1521
        %1523 = vmatmul.f32.gmra.mxu0 %v1191
        %v1524 = vpop.f32.mrf.mxu0
        %v1525 = vadd.f32 %v1493, %v1524
        %1526 = vdwg.mxu0
        %1527 = vmatpush.msra.mxu0 0.0
        %1528 = vmatpush.msra.mxu0 0.0
        %1529 = vmatpush.msra.mxu0 0.0
        %1530 = vmatpush.msra.mxu0 0.0
        %1531 = vmatpush.msra.mxu0 0.0
        %1532 = vmatpush.msra.mxu0 %v1152
        %1533 = vmatpush.msra.mxu0 %v1148
        %1534 = vmatpush.msra.mxu0 %v1144
        %1535 = vmatpush.msra.mxu0 %v1140
        %1536 = vmatpush.msra.mxu0 %v1136
        %1537 = vmatpush.msra.mxu0 %v1117
        %1538 = vmatpush.msra.mxu0 %v1113
        %1539 = vmatpush.msra.mxu0 %v1109
        %1540 = vmatpush.msra.mxu0 %v1105
        %1541 = vmatpush.msra.mxu0 %v1101
        %1542 = vmatpush.msra.mxu0 %v1082
        %1543 = vmatmul.f32.gmra.mxu0 %v1225
        %v1544 = vpop.f32.mrf.mxu0
        %v1545 = vadd.f32 %v1513, %v1544
        %1546 = vmatmul.f32.gmra.mxu0 %v1228
        %v1547 = vpop.f32.mrf.mxu0
        %v1548 = vadd.f32 %v1516, %v1547
        %1549 = vmatmul.f32.gmra.mxu0 %v1231
        %v1550 = vpop.f32.mrf.mxu0
        %v1551 = vadd.f32 %v1519, %v1550
        %1552 = vmatmul.f32.gmra.mxu0 %v1234
        %v1553 = vpop.f32.mrf.mxu0
        %v1554 = vadd.f32 %v1522, %v1553
        %1555 = vmatmul.f32.gmra.mxu0 %v1237
        %v1556 = vpop.f32.mrf.mxu0
        %v1557 = vadd.f32 %v1525, %v1556
        %1558 = vdwg.mxu0
        %vm1559 = vcmp.gt.f32.partialorder %v1385, 0.0
        %vm1560 = vcmp.gt.f32.partialorder %v1545, 0.0
        %vm1561 = vcmp.gt.f32.partialorder %v1388, 0.0
        %vm1562 = vcmp.gt.f32.partialorder %v1548, 0.0
        %vm1563 = vcmp.gt.f32.partialorder %v1391, 0.0
        %vm1564 = vcmp.gt.f32.partialorder %v1551, 0.0
        %vm1565 = vcmp.gt.f32.partialorder %v1394, 0.0
        %vm1566 = vcmp.gt.f32.partialorder %v1554, 0.0
        %vm1567 = vcmp.gt.f32.partialorder %v1397, 0.0
        %vm1568 = vcmp.gt.f32.partialorder %v1557, 0.0
        %v1569 = vmin.f32 %v1385, 0.0
        %v1570 = vmin.f32 %v1545, 0.0
        %v1571 = vmin.f32 %v1388, 0.0
        %v1572 = vmin.f32 %v1548, 0.0
        %v1573 = vmin.f32 %v1391, 0.0
        %v1574 = vmin.f32 %v1551, 0.0
        %v1575 = vmin.f32 %v1394, 0.0
        %v1576 = vmin.f32 %v1554, 0.0
        %v1577 = vmin.f32 %v1397, 0.0
        %v1578 = vmin.f32 %v1557, 0.0
        %v1579 = vmul.f32 %v1569, 1.442695
        %v1580 = vpow.pop %v1579
        %v1581 = vmul.f32 %v1570, 1.442695
        %v1582 = vpow.pop %v1581
        %v1583 = vmul.f32 %v1571, 1.442695
        %v1584 = vpow.pop %v1583
        %v1585 = vmul.f32 %v1572, 1.442695
        %v1586 = vpow.pop %v1585
        %v1587 = vmul.f32 %v1573, 1.442695
        %v1588 = vpow.pop %v1587
        %v1589 = vmul.f32 %v1574, 1.442695
        %v1590 = vpow.pop %v1589
        %v1591 = vmul.f32 %v1575, 1.442695
        %v1592 = vpow.pop %v1591
        %v1593 = vmul.f32 %v1576, 1.442695
        %v1594 = vpow.pop %v1593
        %v1595 = vmul.f32 %v1577, 1.442695
        %v1596 = vpow.pop %v1595
        %v1597 = vmul.f32 %v1578, 1.442695
        %v1598 = vpow.pop %v1597
        %v1599 = vsub.f32 %v1580, 1.0
        %v1600 = vsub.f32 %v1582, 1.0
        %v1601 = vsub.f32 %v1584, 1.0
        %v1602 = vsub.f32 %v1586, 1.0
        %v1603 = vsub.f32 %v1588, 1.0
        %v1604 = vsub.f32 %v1590, 1.0
        %v1605 = vsub.f32 %v1592, 1.0
        %v1606 = vsub.f32 %v1594, 1.0
        %v1607 = vsub.f32 %v1596, 1.0
        %v1608 = vsub.f32 %v1598, 1.0
        %v1609 = vsel %vm1559, %v1385, %v1599
        %v1610 = vsel %vm1560, %v1545, %v1600
        %v1611 = vsel %vm1561, %v1388, %v1601
        %v1612 = vsel %vm1562, %v1548, %v1602
        %v1613 = vsel %vm1563, %v1391, %v1603
        %v1614 = vsel %vm1564, %v1551, %v1604
        %v1615 = vsel %vm1565, %v1394, %v1605
        %v1616 = vsel %vm1566, %v1554, %v1606
        %v1617 = vsel %vm1567, %v1397, %v1607
        %v1618 = vsel %vm1568, %v1557, %v1608
        %v1619 = vld [vmem:[%s7] sm:$0xff]
        %v1620 = vld [vmem:[%s7 + $0x8] sm:$0xff]
        %v1621 = vld [vmem:[%s7 + $0x10] sm:$0xff]
        %v1622 = vld [vmem:[%s7 + $0x18] sm:$0xff]
        %v1623 = vld [vmem:[%s7 + $0x20] sm:$0xff]
        %v1624 = vld [vmem:[%s7 + $0x28] sm:$0xff]
        %v1625 = vld [vmem:[%s7 + $0x30] sm:$0xff]
        %v1626 = vld [vmem:[%s7 + $0x38] sm:$0xff]
        %v1627 = vld [vmem:[%s7 + $0x40] sm:$0xff]
        %v1628 = vld [vmem:[%s7 + $0x48] sm:$0xff]
        %v1629 = vld [vmem:[%s7 + $0x50] sm:$0xff]
        %v1630 = vld [vmem:[%s7 + $0x58] sm:$0xff]
        %v1631 = vld [vmem:[%s7 + $0x60] sm:$0xff]
        %v1632 = vld [vmem:[%s7 + $0x68] sm:$0xff]
        %v1633 = vld [vmem:[%s7 + $0x70] sm:$0xff]
        %v1634 = vld [vmem:[%s7 + $0x78] sm:$0xff]
        %v1635 = vld [vmem:[%s7 + $0x80] sm:$0xff]
        %v1636 = vld [vmem:[%s7 + $0x88] sm:$0xff]
        %v1637 = vld [vmem:[%s7 + $0x90] sm:$0x3]
        %vm1638 = vcmask 146432
        %v1640 = vsel %vm1638, %v1610, 0
        %v1643 = vsel %vm1638, %v1612, 0
        %v1646 = vsel %vm1638, %v1614, 0
        %v1649 = vsel %vm1638, %v1616, 0
        %v1652 = vsel %vm1638, %v1618, 0
        %v1655 = vsel %vm449, %v1637, 0
        %1657 = vmatpush.msra.mxu0 %v1634
        %1658 = vmatpush.msra.mxu0 %v1633
        %1659 = vmatpush.msra.mxu0 %v1632
        %1660 = vmatpush.msra.mxu0 %v1631
        %1661 = vmatpush.msra.mxu0 %v1630
        %1662 = vmatpush.msra.mxu0 %v1629
        %1663 = vmatpush.msra.mxu0 %v1628
        %1664 = vmatpush.msra.mxu0 %v1627
        %1665 = vmatpush.msra.mxu0 %v1626
        %1666 = vmatpush.msra.mxu0 %v1625
        %1667 = vmatpush.msra.mxu0 %v1624
        %1668 = vmatpush.msra.mxu0 %v1623
        %1669 = vmatpush.msra.mxu0 %v1622
        %1670 = vmatpush.msra.mxu0 %v1621
        %1671 = vmatpush.msra.mxu0 %v1620
        %1672 = vmatpush.msra.mxu0 %v1619
        %1673 = vmatmul.f32.gmra.mxu0 %v1609
        %v1674 = vpop.f32.mrf.mxu0
        %v1675 = vadd.f32 0.0, %v1674
        %1676 = vmatmul.f32.gmra.mxu0 %v1611
        %v1677 = vpop.f32.mrf.mxu0
        %v1678 = vadd.f32 0.0, %v1677
        %1679 = vmatmul.f32.gmra.mxu0 %v1613
        %v1680 = vpop.f32.mrf.mxu0
        %v1681 = vadd.f32 0.0, %v1680
        %1682 = vmatmul.f32.gmra.mxu0 %v1615
        %v1683 = vpop.f32.mrf.mxu0
        %v1684 = vadd.f32 0.0, %v1683
        %1685 = vmatmul.f32.gmra.mxu0 %v1617
        %v1686 = vpop.f32.mrf.mxu0
        %v1687 = vadd.f32 0.0, %v1686
        %1688 = vdwg.mxu0
        %1689 = vmatpush.msra.mxu0 0.0
        %1690 = vmatpush.msra.mxu0 0.0
        %1691 = vmatpush.msra.mxu0 0.0
        %1692 = vmatpush.msra.mxu0 0.0
        %1693 = vmatpush.msra.mxu0 0.0
        %1694 = vmatpush.msra.mxu0 0.0
        %1695 = vmatpush.msra.mxu0 0.0
        %1696 = vmatpush.msra.mxu0 0.0
        %1697 = vmatpush.msra.mxu0 0.0
        %1698 = vmatpush.msra.mxu0 0.0
        %1699 = vmatpush.msra.mxu0 0.0
        %1700 = vmatpush.msra.mxu0 0.0
        %1701 = vmatpush.msra.mxu0 0.0
        %1702 = vmatpush.msra.mxu0 %v1655
        %1703 = vmatpush.msra.mxu0 %v1636
        %1704 = vmatpush.msra.mxu0 %v1635
        %1705 = vmatmul.f32.gmra.mxu0 %v1640
        %v1706 = vpop.f32.mrf.mxu0
        %v1707 = vadd.f32 %v1675, %v1706
        %1708 = vmatmul.f32.gmra.mxu0 %v1643
        %v1709 = vpop.f32.mrf.mxu0
        %v1710 = vadd.f32 %v1678, %v1709
        %1711 = vmatmul.f32.gmra.mxu0 %v1646
        %v1712 = vpop.f32.mrf.mxu0
        %v1713 = vadd.f32 %v1681, %v1712
        %1714 = vmatmul.f32.gmra.mxu0 %v1649
        %v1715 = vpop.f32.mrf.mxu0
        %v1716 = vadd.f32 %v1684, %v1715
        %1717 = vmatmul.f32.gmra.mxu0 %v1652
        %v1718 = vpop.f32.mrf.mxu0
        %v1719 = vadd.f32 %v1687, %v1718
        %1720 = vdwg.mxu0
        %v1721 = vld [vmem:[%s5] sm:$0xff]
        %v1722 = vld [vmem:[%s5 + $0x8] sm:$0xff]
        %v1723 = vld [vmem:[%s5 + $0x10] sm:$0xff]
        %v1724 = vld [vmem:[%s5 + $0x18] sm:$0xff]
        %v1725 = vld [vmem:[%s5 + $0x20] sm:$0xff]
        %v1726 = vld [vmem:[%s6] sm:$0xff]
        %v1727 = vld [vmem:[%s6 + $0x8] sm:$0xff]
        %v1728 = vld [vmem:[%s6 + $0x10] sm:$0xff]
        %v1729 = vld [vmem:[%s6 + $0x18] sm:$0xff]
        %v1730 = vld [vmem:[%s6 + $0x20] sm:$0xff]
        %1732 = vset.pattern.permute.xlu0 0
        %1733 = vperm.xlu0 %1732, %v1726
        %v1734 = vpop.permute.xlu0 %1733
        %1737 = vset.pattern.permute.xlu0 0
        %1738 = vperm.xlu0 %1737, %v1727
        %v1739 = vpop.permute.xlu0 %1738
        %1742 = vset.pattern.permute.xlu0 0
        %1743 = vperm.xlu0 %1742, %v1728
        %v1744 = vpop.permute.xlu0 %1743
        %1747 = vset.pattern.permute.xlu0 0
        %1748 = vperm.xlu0 %1747, %v1729
        %v1749 = vpop.permute.xlu0 %1748
        %1752 = vset.pattern.permute.xlu0 0
        %1753 = vperm.xlu0 %1752, %v1730
        %v1754 = vpop.permute.xlu0 %1753
        %vm1756 = vcmask 326656
        %v1758 = vsel %vm1756, %v1721, 0
        %v1761 = vsel %vm1756, %v1722, 0
        %v1764 = vsel %vm1756, %v1723, 0
        %v1767 = vsel %vm1756, %v1724, 0
        %v1770 = vsel %vm1756, %v1725, 0
        %1772 = vmatpush.msra.mxu0 0.0
        %1773 = vmatpush.msra.mxu0 0.0
        %1774 = vmatpush.msra.mxu0 0.0
        %1775 = vmatpush.msra.mxu0 0.0
        %1776 = vmatpush.msra.mxu0 0.0
        %1777 = vmatpush.msra.mxu0 0.0
        %1778 = vmatpush.msra.mxu0 0.0
        %1779 = vmatpush.msra.mxu0 0.0
        %1780 = vmatpush.msra.mxu0 0.0
        %1781 = vmatpush.msra.mxu0 0.0
        %1782 = vmatpush.msra.mxu0 0.0
        %1783 = vmatpush.msra.mxu0 %v1719
        %1784 = vmatpush.msra.mxu0 %v1716
        %1785 = vmatpush.msra.mxu0 %v1713
        %1786 = vmatpush.msra.mxu0 %v1710
        %1787 = vmatpush.msra.mxu0 %v1707
        %1788 = vmatmul.f32.gmra.mxu0 %v1758
        %v1789 = vpop.f32.mrf.mxu0
        %v1790 = vadd.f32 %v1734, %v1789
        %1791 = vmatmul.f32.gmra.mxu0 %v1761
        %v1792 = vpop.f32.mrf.mxu0
        %v1793 = vadd.f32 %v1739, %v1792
        %1794 = vmatmul.f32.gmra.mxu0 %v1764
        %v1795 = vpop.f32.mrf.mxu0
        %v1796 = vadd.f32 %v1744, %v1795
        %1797 = vmatmul.f32.gmra.mxu0 %v1767
        %v1798 = vpop.f32.mrf.mxu0
        %v1799 = vadd.f32 %v1749, %v1798
        %1800 = vmatmul.f32.gmra.mxu0 %v1770
        %v1801 = vpop.f32.mrf.mxu0
        %v1802 = vadd.f32 %v1754, %v1801
        %1803 = vdwg.mxu0
        %vm1804 = vcmask 48128
        %1805 = vst.msk [vmem:[%s319] sm:$0xff] %vm1804, %v1790
        %1806 = vst.msk [vmem:[%s319 + $0x8] sm:$0xff] %vm1804, %v1793
        %1807 = vst.msk [vmem:[%s319 + $0x10] sm:$0xff] %vm1804, %v1796
        %1808 = vst.msk [vmem:[%s319 + $0x18] sm:$0xff] %vm1804, %v1799
        %1809 = vst.msk [vmem:[%s319 + $0x20] sm:$0xff] %vm1804, %v1802
        %p1810 = scmp.lt.s32.totalorder %s20, 1
        %s1811 = scalar_select %p1810, %s20, 1
        %s1812 = smul.addr %s1811, 5
        %s1813 = smul.addr %s1812, 8
        %s1814 = scalar_lea.vmem %s8, %s1813
        // Predicated region
        $region57: #{tpu_custom_call.1} parent=51 // pred_check
          %p1815 = pneg %p211
        $region58: #{tpu_custom_call.1} parent=51 // pred_check_branch
          %1817 = sbr.rel (%p1815) target = $region60
        $region59: #{tpu_custom_call.1} parent=51 // pred_region
          _
        $region60: #{tpu_custom_call.1} parent=51 // pred_fallthru
          _
      $region52: #{tpu_custom_call.1} parent=5 // pred_fallthru
        _
      %p1818 = scmp.le.s32.totalorder 2, %s15
      // Predicated region
      $region61: #{tpu_custom_call.1} parent=5 // pred_check
        %p1819 = pneg %p1818
      $region62: #{tpu_custom_call.1} parent=5 // pred_check_branch
        %1821 = sbr.rel (%p1819) target = $region64
      $region63: #{tpu_custom_call.1} parent=5 // pred_region
        %s1822 = ssub.s32 %s15, 2
        // Predicated region
        $region65: #{tpu_custom_call.1} parent=63 // pred_check
          %p1823 = pneg %p217
        $region66: #{tpu_custom_call.1} parent=63 // pred_check_branch
          %1825 = sbr.rel (%p1823) target = $region68
        $region67: #{tpu_custom_call.1} parent=63 // pred_region
          %p1826 = scmp.lt.s32.totalorder %s21, 1
          %s1827 = scalar_select %p1826, %s21, 1
          %s1828 = smul.addr %s1827, 5
          %s1829 = smul.addr %s1828, 8
          %s1830 = scalar_lea.vmem %s8, %s1829
        $region68: #{tpu_custom_call.1} parent=63 // pred_fallthru
          _
      $region64: #{tpu_custom_call.1} parent=5 // pred_fallthru
        _
    $region6: #{tpu_custom_call.1} parent=1 // loop_footer
      %s19 = sadd.s32 1, %s15
    $region7: #{tpu_custom_call.1} parent=1 // loop_footer_branch
      %14 = sbr.rel target = $region3
    $region8: #{tpu_custom_call.1} parent=1 // loop_exit
      _
    %1831 = vsyncpa [#allocation3], 1
    %s1832 = scalar_lea.sflag [#allocation3], 1
    %1833 = vsyncpa %s1832, 1

</llo_original>
